<compile_context>
chip_gen: v7x
topology: tpu7x:2x2x1
jax: 0.10.0
libtpu: 0.0.40
codegen_flags: <defaults>
</compile_context>

<pallas_src>
import functools
import math

import numpy as np
import jax
import jax.numpy as jnp
from jax.experimental import pallas as pl
from jax.experimental.pallas import tpu as pltpu


# ----------------------------------------------------------------------------
# helpers
# ----------------------------------------------------------------------------
def _round_up(n: int, m: int) -> int:
    return ((n + m - 1) // m) * m


def _largest_tile(dim: int, max_tile: int) -> int:
    """Largest multiple of 128 that divides `dim` (dim must be a mult of 128)."""
    t = min(dim, max(128, (max_tile // 128) * 128))
    while dim % t:
        t -= 128
    return t


_VMEM_HEADROOM = 8 * 1024 * 1024


@functools.lru_cache(maxsize=None)
def _physical_vmem_bytes() -> int:
    # Generation-aware: 128 MiB on v5e/v6e, 64 MiB on v7x.
    try:
        return int(pltpu.get_tpu_info().vmem_capacity_bytes)
    except Exception:
        return 64 * 1024 * 1024          # conservative fallback (v7x)


def _vmem_limit_bytes(est: int) -> int:
    cap = max(_physical_vmem_bytes() - _VMEM_HEADROOM, 32 * 1024 * 1024)
    want = max(32 * 1024 * 1024, int(1.5 * est))
    return int(min(want, cap))


# ----------------------------------------------------------------------------
# Kernel 1: tiled projection matmul (QKV projection)
# ----------------------------------------------------------------------------
def _matmul_kernel(x_ref, w_ref, o_ref):
    o_ref[...] = jnp.dot(x_ref[...], w_ref[...],
                         preferred_element_type=jnp.float32).astype(o_ref.dtype)


def _pallas_matmul(x_bf16, w_bf16, *, out_dtype, max_tile_m=512, max_tile_n=1024):
    """x: (Mp, Kp) bf16, w: (Kp, Np) bf16; all dims multiples of 128."""
    Mp, Kp = x_bf16.shape
    Kp2, Np = w_bf16.shape
    assert Kp == Kp2, (Kp, Kp2)
    tile_m = _largest_tile(Mp, max_tile_m)
    tile_n = _largest_tile(Np, max_tile_n)
    out_bytes = jnp.dtype(out_dtype).itemsize
    est = (2 * tile_m * Kp * 2 + 2 * Kp * tile_n * 2
           + 2 * tile_m * tile_n * out_bytes + tile_m * tile_n * 4)

    return pl.pallas_call(
        _matmul_kernel,
        out_shape=jax.ShapeDtypeStruct((Mp, Np), out_dtype),
        grid_spec=pltpu.PrefetchScalarGridSpec(
            num_scalar_prefetch=0,
            grid=(Mp // tile_m, Np // tile_n),
            in_specs=[
                pl.BlockSpec((tile_m, Kp), lambda i, j: (i, 0)),
                pl.BlockSpec((Kp, tile_n), lambda i, j: (0, j)),
            ],
            out_specs=pl.BlockSpec((tile_m, tile_n), lambda i, j: (i, j)),
        ),
        compiler_params=pltpu.CompilerParams(
            dimension_semantics=("parallel", "parallel"),
            vmem_limit_bytes=_vmem_limit_bytes(est),
        ),
    )(x_bf16, w_bf16)


# ----------------------------------------------------------------------------
# Kernel 2: fused RoPE + head-split relayout
#   (B*Sp, 3*H*D) -> q, k, v : (B*H, Sp, D), q pre-scaled by softmax scale.
# ----------------------------------------------------------------------------
def _rope_relayout_kernel(q_ref, k_ref, v_ref, cos_ref, sin_ref,
                          qo_ref, ko_ref, vo_ref, *, half, q_scale):
    cos = cos_ref[...]            # (ts, D) f32
    sin_s = sin_ref[...]          # sign-folded: [-sin, +sin]
    qf = q_ref[...].astype(jnp.float32)
    kf = k_ref[...].astype(jnp.float32)
    q_rot = qf * cos + pltpu.roll(qf, half, 1) * sin_s
    k_rot = kf * cos + pltpu.roll(kf, half, 1) * sin_s
    qo_ref[0] = (q_rot * q_scale).astype(qo_ref.dtype)
    ko_ref[0] = k_rot.astype(ko_ref.dtype)
    vo_ref[0] = v_ref[...]


def _rope_relayout(qkv, cos, sin_signed, *, B, Sp, H, D, q_scale, max_tile=512):
    BH = B * H
    tile_s = _largest_tile(Sp, max_tile)
    n_st = Sp // tile_s
    half = D // 2

    def q_map(i, bh):
        return (bh // H) * n_st + i, bh % H

    def k_map(i, bh):
        return (bh // H) * n_st + i, H + bh % H

    def v_map(i, bh):
        return (bh // H) * n_st + i, 2 * H + bh % H

    cs_map = lambda i, bh: (i, 0)        # constant across inner head axis -> resident
    out_map = lambda i, bh: (bh, i, 0)

    blk = tile_s * D
    est = (2 * 3 * blk * 2 + 2 * 2 * blk * 4 + 2 * 3 * blk * 2 + 6 * blk * 4)

    kern = functools.partial(_rope_relayout_kernel, half=half, q_scale=q_scale)
    q_out, k_out, v_out = pl.pallas_call(
        kern,
        out_shape=[jax.ShapeDtypeStruct((BH, Sp, D), jnp.bfloat16)] * 3,
        grid_spec=pltpu.PrefetchScalarGridSpec(
            num_scalar_prefetch=0,
            grid=(n_st, BH),
            in_specs=[
                pl.BlockSpec((tile_s, D), q_map),
                pl.BlockSpec((tile_s, D), k_map),
                pl.BlockSpec((tile_s, D), v_map),
                pl.BlockSpec((tile_s, D), cs_map),
                pl.BlockSpec((tile_s, D), cs_map),
            ],
            out_specs=[pl.BlockSpec((1, tile_s, D), out_map)] * 3,
        ),
        compiler_params=pltpu.CompilerParams(
            dimension_semantics=("parallel", "parallel"),
            vmem_limit_bytes=_vmem_limit_bytes(est),
        ),
    )(qkv, qkv, qkv, cos, sin_signed)
    return q_out, k_out, v_out


# ----------------------------------------------------------------------------
# Kernel 3: block-diagonal flash attention (online softmax, varlen skipping)
# ----------------------------------------------------------------------------
def _flash_attn_kernel(kvs_ref, kvc_ref, segq_ref, segk_ref, q_ref, k_ref, v_ref,
                       o_ref, m_sc, l_sc, acc_sc, *, mask_value):
    qi = pl.program_id(1)
    ki = pl.program_id(2)

    @pl.when(ki == 0)
    def _():
        m_sc[...] = jnp.full(m_sc.shape, mask_value, m_sc.dtype)
        l_sc[...] = jnp.zeros_like(l_sc)
        acc_sc[...] = jnp.zeros_like(acc_sc)

    # Only do work for k tiles that overlap this q tile's segments.
    @pl.when(ki < kvc_ref[qi])
    def _():
        q = q_ref[0]                      # (tq, D) bf16, pre-rotated + pre-scaled
        k = k_ref[0]                      # (tk, D) bf16, pre-rotated
        s = jax.lax.dot_general(q, k, (((1,), (1,)), ((), ())),
                                preferred_element_type=jnp.float32)
        mask = segq_ref[...] == segk_ref[...]      # (tq,1)==(1,tk) -> (tq,tk)
        s = jnp.where(mask, s, mask_value)

        m_prev = m_sc[...]
        m_next = jnp.maximum(m_prev, jnp.max(s, axis=-1, keepdims=True))
        alpha = jnp.exp(m_prev - m_next)
        p = jnp.where(mask, jnp.exp(s - m_next), 0.0)   # robust under full-mask rows
        l_sc[...] = alpha * l_sc[...] + jnp.sum(p, axis=-1, keepdims=True)
        acc_sc[...] = alpha * acc_sc[...] + jnp.dot(
            p.astype(jnp.bfloat16), v_ref[0], preferred_element_type=jnp.float32)
        m_sc[...] = m_next

    @pl.when(ki == pl.num_programs(2) - 1)
    def _():
        o_ref[0] = (acc_sc[...] *
                    pl.reciprocal(l_sc[...], approx=True)).astype(o_ref.dtype)


def _pallas_varlen_attention(q, k, v, seg_ids_np, kv_start_np, kv_count_np, *, tile):
    """q,k,v: (BH, Sp, D) bf16 (q pre-scaled); seg/kv metadata host-computed."""
    BH, Sp, D = q.shape
    n_qt = Sp // tile
    max_kv = int(kv_count_np.max())

    seg_q = jnp.asarray(seg_ids_np.reshape(Sp, 1))
    seg_k = jnp.asarray(seg_ids_np.reshape(1, Sp))
    kv_start = jnp.asarray(kv_start_np)
    kv_count = jnp.asarray(kv_count_np)

    def kv_block(qi, ki, kvs, kvc):
        # Clamp so ragged (inactive) steps keep the same block index -> no re-DMA.
        return kvs[qi] + jnp.minimum(ki, kvc[qi] - 1)

    est = (2 * 3 * tile * D * 2            # q/k/v blocks (bf16, double-buffered)
           + 2 * tile * D * 2              # output block
           + 2 * 2 * tile * 4              # segment id blocks (int32)
           + tile * D * 4 + 2 * tile * 4   # acc + m + l scratch
           + 4 * tile * tile * 4)          # f32 score/p/mask intermediates

    kern = functools.partial(_flash_attn_kernel, mask_value=-1e30)

    return pl.pallas_call(
        kern,
        out_shape=jax.ShapeDtypeStruct((BH, Sp, D), jnp.bfloat16),
        grid_spec=pltpu.PrefetchScalarGridSpec(
            num_scalar_prefetch=2,
            grid=(BH, n_qt, max_kv),
            in_specs=[
                pl.BlockSpec((tile, 1), lambda h, qi, ki, kvs, kvc: (qi, 0)),
                pl.BlockSpec((1, tile),
                             lambda h, qi, ki, kvs, kvc: (0, kv_block(qi, ki, kvs, kvc))),
                pl.BlockSpec((1, tile, D), lambda h, qi, ki, kvs, kvc: (h, qi, 0)),
                pl.BlockSpec((1, tile, D),
                             lambda h, qi, ki, kvs, kvc: (h, kv_block(qi, ki, kvs, kvc), 0)),
                pl.BlockSpec((1, tile, D),
                             lambda h, qi, ki, kvs, kvc: (h, kv_block(qi, ki, kvs, kvc), 0)),
            ],
            out_specs=pl.BlockSpec((1, tile, D), lambda h, qi, ki, kvs, kvc: (h, qi, 0)),
            scratch_shapes=[
                pltpu.VMEM((tile, 1), jnp.float32),   # m
                pltpu.VMEM((tile, 1), jnp.float32),   # l
                pltpu.VMEM((tile, D), jnp.float32),   # acc
            ],
        ),
        compiler_params=pltpu.CompilerParams(
            dimension_semantics=("parallel", "parallel", "arbitrary"),
            vmem_limit_bytes=_vmem_limit_bytes(est),
        ),
    )(kv_start, kv_count, seg_q, seg_k, q, k, v)


# ----------------------------------------------------------------------------
# Kernel 4: output projection with fused head contraction
#   out[b*Sp+s, :] = sum_h ctx[b*H+h, s, :] @ W_proj[h*D:(h+1)*D, :]
# ----------------------------------------------------------------------------
def _proj_kernel(ctx_ref, w_ref, o_ref, acc_ref):
    h = pl.program_id(2)

    @pl.when(h == 0)
    def _():
        acc_ref[...] = jnp.zeros_like(acc_ref)

    acc_ref[...] += jnp.dot(ctx_ref[0], w_ref[...],
                            preferred_element_type=jnp.float32)

    @pl.when(h == pl.num_programs(2) - 1)
    def _():
        o_ref[...] = acc_ref[...].astype(o_ref.dtype)


def _pallas_out_proj(ctx, w_proj, *, B, Sp, H, D, out_dtype,
                     max_tile_m=512, max_tile_n=1024):
    """ctx: (B*H, Sp, D) bf16, w_proj: (H*D, Np) bf16 -> (B*Sp, Np)."""
    Np = w_proj.shape[1]
    tile_m = _largest_tile(Sp, max_tile_m)
    tile_n = _largest_tile(Np, max_tile_n)
    n_mt = Sp // tile_m
    Mp = B * Sp

    def ctx_map(m, j, h):
        return (m // n_mt) * H + h, m % n_mt, 0

    def w_map(m, j, h):
        return h, j

    def out_map(m, j, h):
        return m, j

    out_bytes = jnp.dtype(out_dtype).itemsize
    est = (2 * tile_m * D * 2 + 2 * D * tile_n * 2
           + 2 * tile_m * tile_n * out_bytes + tile_m * tile_n * 4)

    return pl.pallas_call(
        _proj_kernel,
        out_shape=jax.ShapeDtypeStruct((Mp, Np), out_dtype),
        grid_spec=pltpu.PrefetchScalarGridSpec(
            num_scalar_prefetch=0,
            grid=(B * n_mt, Np // tile_n, H),
            in_specs=[
                pl.BlockSpec((1, tile_m, D), ctx_map),
                pl.BlockSpec((D, tile_n), w_map),
            ],
            out_specs=pl.BlockSpec((tile_m, tile_n), out_map),
            scratch_shapes=[pltpu.VMEM((tile_m, tile_n), jnp.float32)],
        ),
        compiler_params=pltpu.CompilerParams(
            dimension_semantics=("parallel", "parallel", "arbitrary"),
            vmem_limit_bytes=_vmem_limit_bytes(est),
        ),
    )(ctx, w_proj)


# ----------------------------------------------------------------------------
# One-time weight preparation (hoisted out of the per-call hot path)
# ----------------------------------------------------------------------------
def prepare_weights(w_qkv, w_proj):
    """w_qkv: (E, 3*H*D), w_proj: (H*D, E) -> bf16-cast, lane-padded copies."""
    E, N3 = w_qkv.shape
    HD, E2 = w_proj.shape
    assert E == E2 and N3 == 3 * HD, (w_qkv.shape, w_proj.shape)
    Ep = _round_up(E, 128)
    w_qkv_p = jnp.pad(w_qkv.astype(jnp.bfloat16), ((0, Ep - E), (0, 0)))
    w_proj_p = jnp.pad(w_proj.astype(jnp.bfloat16), ((0, 0), (0, Ep - E)))
    return w_qkv_p, w_proj_p


# ----------------------------------------------------------------------------
# Full module forward
# ----------------------------------------------------------------------------
def glm4v_vision_attention(x, w_qkv_prepped, w_proj_prepped, cu_seqlens,
                           rotary_pos_emb, num_heads, *, max_attn_tile=512):
    """
    x:               (S, B, E)
    w_qkv_prepped:   (Ep, 3*H*D) bf16  from prepare_weights()
    w_proj_prepped:  (H*D, Ep)   bf16  from prepare_weights()
    cu_seqlens:      host int array (num_seq + 1,), cumulative sequence lengths
    rotary_pos_emb:  (S, D//2)
    Returns (S, B, E) in x.dtype.
    """
    S, B, E = x.shape
    Ep, N3 = w_qkv_prepped.shape
    HD = N3 // 3
    H = num_heads
    D = HD // H
    assert D % 128 == 0, "head_dim must be a multiple of 128"
    # TODO(synk): head_dim not a multiple of 128 needs a lane-padded attention path.
    scale = 1.0 / math.sqrt(D)

    Sp = _round_up(S, 128)
    attn_tile = _largest_tile(Sp, max_attn_tile)

    # ---- host-side varlen metadata (cu_seqlens shapes the kernel grids) ----
    # TODO(synk): requires host-visible cu_seqlens (true in vLLM vision path).
    cu = np.asarray(cu_seqlens, dtype=np.int64).reshape(-1)
    bounds = cu if int(cu[-1]) == Sp else np.concatenate([cu, [Sp]])
    seg = (np.searchsorted(bounds, np.arange(Sp), side="right") - 1).astype(np.int32)
    n_qt = Sp // attn_tile
    kv_start = np.zeros((n_qt,), np.int32)
    kv_count = np.zeros((n_qt,), np.int32)
    for qi in range(n_qt):
        s0 = int(seg[qi * attn_tile])
        s1 = int(seg[(qi + 1) * attn_tile - 1])
        k0 = int(bounds[s0])
        k1 = int(bounds[s1 + 1])
        kv_start[qi] = k0 // attn_tile
        kv_count[qi] = -(-k1 // attn_tile) - k0 // attn_tile

    # ---- input relayout: (S, B, E) -> (B*Sp, Ep) row order (b, s) ----------
    xb = jnp.transpose(x, (1, 0, 2)).astype(jnp.bfloat16)
    xb = jnp.pad(xb, ((0, 0), (0, Sp - S), (0, Ep - E)))
    x2 = xb.reshape(B * Sp, Ep)

    # ---- QKV projection -----------------------------------------------------
    qkv = _pallas_matmul(x2, w_qkv_prepped, out_dtype=jnp.bfloat16)   # (B*Sp, 3HD)

    # ---- RoPE tables: sign folded into sin, softmax scale folded into q -----
    rot = jnp.pad(rotary_pos_emb.astype(jnp.float32), ((0, Sp - S), (0, 0)))
    cos = jnp.concatenate([jnp.cos(rot)] * 2, axis=-1)        # (Sp, D)
    sin = jnp.sin(rot)
    sin_signed = jnp.concatenate([-sin, sin], axis=-1)        # (Sp, D)

    # ---- fused RoPE + head relayout -----------------------------------------
    qh, kh, vh = _rope_relayout(qkv, cos, sin_signed, B=B, Sp=Sp, H=H, D=D,
                                q_scale=scale)                # each (B*H, Sp, D)

    # ---- block-diagonal flash attention -------------------------------------
    ctx = _pallas_varlen_attention(qh, kh, vh, seg, kv_start, kv_count,
                                   tile=attn_tile)            # (B*H, Sp, D)

    # ---- output projection (head relayout fused into the reduction axis) ----
    out = _pallas_out_proj(ctx, w_proj_prepped, B=B, Sp=Sp, H=H, D=D,
                           out_dtype=x.dtype)                 # (B*Sp, Ep)
    out = out.reshape(B, Sp, Ep)[:, :S, :E]
    return jnp.transpose(out, (1, 0, 2))


# ----------------------------------------------------------------------------
# Pure-JAX reference (mirrors the torch module's math / precision policy)
# ----------------------------------------------------------------------------
def reference_attention(x, w_qkv, w_proj, cu_seqlens, rotary_pos_emb, num_heads):
    S, B, E = x.shape
    HD = w_qkv.shape[1] // 3
    D = HD // num_heads
    scale = 1.0 / math.sqrt(D)

    xb = x.astype(jnp.bfloat16)
    qkv = jnp.einsum("sbe,ef->sbf", xb, w_qkv.astype(jnp.bfloat16),
                     preferred_element_type=jnp.float32).astype(jnp.bfloat16)
    q, k, v = jnp.split(qkv, 3, axis=-1)
    q = q.reshape(S, B, num_heads, D)
    k = k.reshape(S, B, num_heads, D)
    v = v.reshape(S, B, num_heads, D)

    cos = jnp.concatenate([jnp.cos(rotary_pos_emb)] * 2, axis=-1)
    sin = jnp.concatenate([jnp.sin(rotary_pos_emb)] * 2, axis=-1)

    def rope(t):
        tf = t.astype(jnp.float32)
        t1, t2 = tf[..., :D // 2], tf[..., D // 2:]
        rot = jnp.concatenate([-t2, t1], axis=-1)
        return (tf * cos[:, None, None, :] +
                rot * sin[:, None, None, :]).astype(jnp.bfloat16)

    q, k = rope(q), rope(k)

    cu = jnp.asarray(np.asarray(cu_seqlens), dtype=jnp.int32)
    pos = jnp.arange(S)
    seg = jnp.sum(pos[:, None] >= cu[None, 1:], axis=-1)
    mask = seg[:, None] == seg[None, :]

    scores = jnp.einsum("sbhd,tbhd->bhst", q, k,
                        preferred_element_type=jnp.float32) * scale
    scores = jnp.where(mask[None, None], scores, -jnp.inf)
    probs = jax.nn.softmax(scores, axis=-1)
    ctx = jnp.einsum("bhst,tbhd->sbhd", probs.astype(jnp.bfloat16), v,
                     preferred_element_type=jnp.float32)
    ctx = ctx.reshape(S, B, HD).astype(jnp.bfloat16)
    out = jnp.einsum("sbf,fe->sbe", ctx, w_proj.astype(jnp.bfloat16),
                     preferred_element_type=jnp.float32)
    return out.astype(x.dtype)


# ----------------------------------------------------------------------------
if __name__ == "__main__":
    # Small shapes consistent with the module (head_dim = 128 as in GLM-4V).
    # S = 500 exercises sequence padding; cu_seqlens gives ragged kv-tile
    # counts so the block-diagonal skipping path is exercised too.
    S, B = 500, 1
    embed_dim = 256
    num_heads = 2
    head_dim = 128
    projection_size = num_heads * head_dim   # 256

    key = jax.random.PRNGKey(0)
    kx, kq, kp, kr = jax.random.split(key, 4)

    x = jax.random.normal(kx, (S, B, embed_dim), dtype=jnp.float32)
    w_qkv = jax.random.normal(kq, (embed_dim, 3 * projection_size),
                              dtype=jnp.float32) / math.sqrt(embed_dim)
    w_proj = jax.random.normal(kp, (projection_size, embed_dim),
                               dtype=jnp.float32) / math.sqrt(projection_size)
    rotary_pos_emb = jax.random.uniform(kr, (S, head_dim // 2), dtype=jnp.float32,
                                        minval=0.0, maxval=2.0 * math.pi)
    cu_seqlens = np.array([0, 128, 384, 500], dtype=np.int32)   # 3 images

    # One-time weight prep (hoisted out of the hot path).
    w_qkv_p, w_proj_p = prepare_weights(w_qkv, w_proj)

    out = glm4v_vision_attention(x, w_qkv_p, w_proj_p, cu_seqlens, rotary_pos_emb,
                                 num_heads, max_attn_tile=128)
    out = jax.block_until_ready(out)

    ref = reference_attention(x, w_qkv, w_proj, cu_seqlens, rotary_pos_emb,
                              num_heads)
    assert out.shape == (S, B, embed_dim), out.shape
    max_err = float(jnp.max(jnp.abs(out - ref)))
    assert jnp.allclose(out, ref, atol=2e-2, rtol=2e-2), max_err

    print("KERNEL_OK")
</pallas_src>

<mosaic_0001>
module attributes {stable_mosaic.version = 11 : i64} {
  func.func @_matmul_kernel(%arg0: i32, %arg1: i32, %arg2: memref<512x256xbf16, #tpu.memory_space<vmem>>, %arg3: memref<256x768xbf16, #tpu.memory_space<vmem>>, %arg4: memref<512x768xbf16, #tpu.memory_space<vmem>>) attributes {dimension_semantics = [#tpu.dimension_semantics<parallel>, #tpu.dimension_semantics<parallel>], iteration_bounds = array<i64: 1, 1>, scalar_prefetch = 0 : i64, scratch_operands = 0 : i64, tpu.core_type = #tpu.core_type<tc>, window_params = [{transform_indices = @transform_0, window_bounds = array<i64: 512, 256>}, {transform_indices = @transform_1, window_bounds = array<i64: 256, 768>}, {transform_indices = @transform_2, window_bounds = array<i64: 512, 768>}]} {
    %c0 = arith.constant 0 : index
    %c0_0 = arith.constant 0 : index
    %0 = vector.load %arg2[%c0, %c0_0] : memref<512x256xbf16, #tpu.memory_space<vmem>>, vector<512x256xbf16>
    %c0_1 = arith.constant 0 : index
    %c0_2 = arith.constant 0 : index
    %1 = vector.load %arg3[%c0_1, %c0_2] : memref<256x768xbf16, #tpu.memory_space<vmem>>, vector<256x768xbf16>
    %cst = arith.constant dense<0.000000e+00> : vector<512x768xf32>
    %2 = tpu.matmul %0, %1, %cst {dimension_numbers = #tpu.dot_dimension_numbers<[1], [0], [0], [1], [0, 0, 1, 1], [], []>} : vector<512x256xbf16>, vector<256x768xbf16>, vector<512x768xf32> -> vector<512x768xf32>
    %3 = arith.truncf %2 : vector<512x768xf32> to vector<512x768xbf16>
    %c0_3 = arith.constant 0 : index
    %c0_4 = arith.constant 0 : index
    %4 = vector.load %arg4[%c0_3, %c0_4] : memref<512x768xbf16, #tpu.memory_space<vmem>>, vector<512x768xbf16>
    tpu.vector_store %arg4[%c0_3, %c0_4], %3 {strides = array<i32>} : memref<512x768xbf16, #tpu.memory_space<vmem>>, vector<512x768xbf16>,
    return
  }
  func.func @transform_0(%arg0: i32, %arg1: i32) -> (i32, i32) {
    %c0_i32 = arith.constant 0 : i32
    %c0_i32_0 = arith.constant 0 : i32
    return %arg0, %c0_i32 : i32, i32
  }
  func.func @transform_1(%arg0: i32, %arg1: i32) -> (i32, i32) {
    %c0_i32 = arith.constant 0 : i32
    %c0_i32_0 = arith.constant 0 : i32
    return %c0_i32, %arg1 : i32, i32
  }
  func.func @transform_2(%arg0: i32, %arg1: i32) -> (i32, i32) {
    %c0_i32 = arith.constant 0 : i32
    return %arg0, %arg1 : i32, i32
  }
}

</mosaic_0001>

<llo_original>
// kernel: tpu_custom_call.1
$region0: #{tpu_custom_call.1}
  #allocation0 [shape = 'u32[]', space=smem, size = 0x4, offset = 0x4, fixed_abs, tag = 'smem constant byte address 0x4 - core index']
  #allocation1 [shape = 'u32[144,128]{1,0:T(1,128)}', space=vmem, size = 0x12000, scoped, tag = 'internal scratch']
  %s0 = inlined_call_operand.hbm [shape: bf16[512,256], index: 0, kind: input, shape index: {}]
  %s1 = inlined_call_operand.hbm [shape: bf16[256,768], index: 1, kind: input, shape index: {}]
  %s2 = inlined_call_operand.hbm [shape: bf16[512,768], index: 2, kind: output, shape index: {}]
  %s3 = sld [smem:[#allocation0]]
  $region26: #{tpu_custom_call.1} parent=0
    _
  %s5 = ssub.s32 1, %s3
  %s6 = scalar_select 0, %s5, %s3
  $region1: #{tpu_custom_call.1} parent=0
    #allocation2 [shape = 'u8[262144]{0}', space=vmem, size = 0x40000, scoped, tag = 'input window, operand 0, single buffered']
    #allocation3 [shape = 's32[1]{0}', space=sflag, size = 0x4, scoped, tag = 'scoped memory for tpu_custom_call.1']
    #allocation4 [shape = 's32[1]{0}', space=sflag, size = 0x4, scoped, tag = 'scoped memory for tpu_custom_call.1']
    #allocation5 [shape = 'u8[393216]{0}', space=vmem, size = 0x60000, scoped, tag = 'input window, operand 1, single buffered']
    #allocation6 [shape = 's32[1]{0}', space=sflag, size = 0x4, scoped, tag = 'scoped memory for tpu_custom_call.1']
    #allocation7 [shape = 'u8[786432]{0}', space=vmem, size = 0xc0000, scoped, tag = 'output window, operand 0, single buffered']
    %7 = vsyncpa [#allocation3], 0
    %8 = vsyncpa [#allocation6], 0
    %9 = vsyncpa [#allocation4], 0
    // Predicated region
    $region2: #{tpu_custom_call.1} parent=1 // pred_check
      _
    $region3: #{tpu_custom_call.1} parent=1 // pred_check_branch
      %11 = sbr.rel (0) target = $region5
    $region4: #{tpu_custom_call.1} parent=1 // pred_region
      %s13 = ssub.s32 8192, 8192
      %14 = vsyncadd [#allocation3], %s13
      %s15 = sshll.u32 [#allocation2], 4
      %s16 = int_to_ptr.vmem [resolvable:$true] %s15
      %21 = dma.hbm_to_vmem [thread:$0]  %s0, 8192, %s16, [#allocation3], 128, 128, 8
    $region5: #{tpu_custom_call.1} parent=1 // pred_fallthru
      _
    // Predicated region
    $region6: #{tpu_custom_call.1} parent=1 // pred_check
      _
    $region7: #{tpu_custom_call.1} parent=1 // pred_check_branch
      %23 = sbr.rel (0) target = $region9
    $region8: #{tpu_custom_call.1} parent=1 // pred_region
      %s25 = ssub.s32 12288, 12288
      %26 = vsyncadd [#allocation6], %s25
      %s27 = sshll.u32 [#allocation5], 4
      %s28 = int_to_ptr.vmem [resolvable:$true] %s27
      %33 = dma.hbm_to_vmem [thread:$0]  %s1, 12288, %s28, [#allocation6], 384, 384, 24
    $region9: #{tpu_custom_call.1} parent=1 // pred_fallthru
      _
    // Predicated region
    $region10: #{tpu_custom_call.1} parent=1 // pred_check
      _
    $region11: #{tpu_custom_call.1} parent=1 // pred_check_branch
      %35 = sbr.rel (0) target = $region13
    $region12: #{tpu_custom_call.1} parent=1 // pred_region
      %36 = dma.done [#allocation3], 8192
    $region13: #{tpu_custom_call.1} parent=1 // pred_fallthru
      _
    // Predicated region
    $region14: #{tpu_custom_call.1} parent=1 // pred_check
      _
    $region15: #{tpu_custom_call.1} parent=1 // pred_check_branch
      %38 = sbr.rel (0) target = $region17
    $region16: #{tpu_custom_call.1} parent=1 // pred_region
      %39 = dma.done [#allocation6], 12288
    $region17: #{tpu_custom_call.1} parent=1 // pred_fallthru
      _
    %v40 = vld [vmem:[#allocation2] sm:$0xff]
    %v41 = vld [vmem:[#allocation2 + $0x8] sm:$0xff]
    %v42 = vld [vmem:[#allocation2 + $0x10] sm:$0xff]
    %v43 = vld [vmem:[#allocation2 + $0x18] sm:$0xff]
    %v44 = vld [vmem:[#allocation2 + $0x20] sm:$0xff]
    %v45 = vld [vmem:[#allocation2 + $0x28] sm:$0xff]
    %v46 = vld [vmem:[#allocation2 + $0x30] sm:$0xff]
    %v47 = vld [vmem:[#allocation2 + $0x38] sm:$0xff]
    %v48 = vld [vmem:[#allocation2 + $0x40] sm:$0xff]
    %v49 = vld [vmem:[#allocation2 + $0x48] sm:$0xff]
    %v50 = vld [vmem:[#allocation2 + $0x50] sm:$0xff]
    %v51 = vld [vmem:[#allocation2 + $0x58] sm:$0xff]
    %v52 = vld [vmem:[#allocation2 + $0x60] sm:$0xff]
    %v53 = vld [vmem:[#allocation2 + $0x68] sm:$0xff]
    %v54 = vld [vmem:[#allocation2 + $0x70] sm:$0xff]
    %v55 = vld [vmem:[#allocation2 + $0x78] sm:$0xff]
    %v56 = vld [vmem:[#allocation2 + $0x80] sm:$0xff]
    %v57 = vld [vmem:[#allocation2 + $0x88] sm:$0xff]
    %v58 = vld [vmem:[#allocation2 + $0x90] sm:$0xff]
    %v59 = vld [vmem:[#allocation2 + $0x98] sm:$0xff]
    %v60 = vld [vmem:[#allocation2 + $0xa0] sm:$0xff]
    %v61 = vld [vmem:[#allocation2 + $0xa8] sm:$0xff]
    %v62 = vld [vmem:[#allocation2 + $0xb0] sm:$0xff]
    %v63 = vld [vmem:[#allocation2 + $0xb8] sm:$0xff]
    %v64 = vld [vmem:[#allocation2 + $0xc0] sm:$0xff]
    %v65 = vld [vmem:[#allocation2 + $0xc8] sm:$0xff]
    %v66 = vld [vmem:[#allocation2 + $0xd0] sm:$0xff]
    %v67 = vld [vmem:[#allocation2 + $0xd8] sm:$0xff]
    %v68 = vld [vmem:[#allocation2 + $0xe0] sm:$0xff]
    %v69 = vld [vmem:[#allocation2 + $0xe8] sm:$0xff]
    %v70 = vld [vmem:[#allocation2 + $0xf0] sm:$0xff]
    %v71 = vld [vmem:[#allocation2 + $0xf8] sm:$0xff]
    %v72 = vld [vmem:[#allocation2 + $0x100] sm:$0xff]
    %v73 = vld [vmem:[#allocation2 + $0x108] sm:$0xff]
    %v74 = vld [vmem:[#allocation2 + $0x110] sm:$0xff]
    %v75 = vld [vmem:[#allocation2 + $0x118] sm:$0xff]
    %v76 = vld [vmem:[#allocation2 + $0x120] sm:$0xff]
    %v77 = vld [vmem:[#allocation2 + $0x128] sm:$0xff]
    %v78 = vld [vmem:[#allocation2 + $0x130] sm:$0xff]
    %v79 = vld [vmem:[#allocation2 + $0x138] sm:$0xff]
    %v80 = vld [vmem:[#allocation2 + $0x140] sm:$0xff]
    %v81 = vld [vmem:[#allocation2 + $0x148] sm:$0xff]
    %v82 = vld [vmem:[#allocation2 + $0x150] sm:$0xff]
    %v83 = vld [vmem:[#allocation2 + $0x158] sm:$0xff]
    %v84 = vld [vmem:[#allocation2 + $0x160] sm:$0xff]
    %v85 = vld [vmem:[#allocation2 + $0x168] sm:$0xff]
    %v86 = vld [vmem:[#allocation2 + $0x170] sm:$0xff]
    %v87 = vld [vmem:[#allocation2 + $0x178] sm:$0xff]
    %v88 = vld [vmem:[#allocation2 + $0x180] sm:$0xff]
    %v89 = vld [vmem:[#allocation2 + $0x188] sm:$0xff]
    %v90 = vld [vmem:[#allocation2 + $0x190] sm:$0xff]
    %v91 = vld [vmem:[#allocation2 + $0x198] sm:$0xff]
    %v92 = vld [vmem:[#allocation2 + $0x1a0] sm:$0xff]
    %v93 = vld [vmem:[#allocation2 + $0x1a8] sm:$0xff]
    %v94 = vld [vmem:[#allocation2 + $0x1b0] sm:$0xff]
    %v95 = vld [vmem:[#allocation2 + $0x1b8] sm:$0xff]
    %v96 = vld [vmem:[#allocation2 + $0x1c0] sm:$0xff]
    %v97 = vld [vmem:[#allocation2 + $0x1c8] sm:$0xff]
    %v98 = vld [vmem:[#allocation2 + $0x1d0] sm:$0xff]
    %v99 = vld [vmem:[#allocation2 + $0x1d8] sm:$0xff]
    %v100 = vld [vmem:[#allocation2 + $0x1e0] sm:$0xff]
    %v101 = vld [vmem:[#allocation2 + $0x1e8] sm:$0xff]
    %v102 = vld [vmem:[#allocation2 + $0x1f0] sm:$0xff]
    %v103 = vld [vmem:[#allocation2 + $0x1f8] sm:$0xff]
    %v104 = vld [vmem:[#allocation5] sm:$0xff]
    %v105 = vld [vmem:[#allocation5 + $0x8] sm:$0xff]
    %v106 = vld [vmem:[#allocation5 + $0x10] sm:$0xff]
    %v107 = vld [vmem:[#allocation5 + $0x18] sm:$0xff]
    %v108 = vld [vmem:[#allocation5 + $0x20] sm:$0xff]
    %v109 = vld [vmem:[#allocation5 + $0x28] sm:$0xff]
    %v110 = vld [vmem:[#allocation5 + $0x30] sm:$0xff]
    %v111 = vld [vmem:[#allocation5 + $0x38] sm:$0xff]
    %v112 = vld [vmem:[#allocation5 + $0x40] sm:$0xff]
    %v113 = vld [vmem:[#allocation5 + $0x48] sm:$0xff]
    %v114 = vld [vmem:[#allocation5 + $0x50] sm:$0xff]
    %v115 = vld [vmem:[#allocation5 + $0x58] sm:$0xff]
    %v116 = vld [vmem:[#allocation5 + $0x60] sm:$0xff]
    %v117 = vld [vmem:[#allocation5 + $0x68] sm:$0xff]
    %v118 = vld [vmem:[#allocation5 + $0x70] sm:$0xff]
    %v119 = vld [vmem:[#allocation5 + $0x78] sm:$0xff]
    %v120 = vld [vmem:[#allocation5 + $0x80] sm:$0xff]
    %v121 = vld [vmem:[#allocation5 + $0x88] sm:$0xff]
    %v122 = vld [vmem:[#allocation5 + $0x90] sm:$0xff]
    %v123 = vld [vmem:[#allocation5 + $0x98] sm:$0xff]
    %v124 = vld [vmem:[#allocation5 + $0xa0] sm:$0xff]
    %v125 = vld [vmem:[#allocation5 + $0xa8] sm:$0xff]
    %v126 = vld [vmem:[#allocation5 + $0xb0] sm:$0xff]
    %v127 = vld [vmem:[#allocation5 + $0xb8] sm:$0xff]
    %v128 = vld [vmem:[#allocation5 + $0xc0] sm:$0xff]
    %v129 = vld [vmem:[#allocation5 + $0xc8] sm:$0xff]
    %v130 = vld [vmem:[#allocation5 + $0xd0] sm:$0xff]
    %v131 = vld [vmem:[#allocation5 + $0xd8] sm:$0xff]
    %v132 = vld [vmem:[#allocation5 + $0xe0] sm:$0xff]
    %v133 = vld [vmem:[#allocation5 + $0xe8] sm:$0xff]
    %v134 = vld [vmem:[#allocation5 + $0xf0] sm:$0xff]
    %v135 = vld [vmem:[#allocation5 + $0xf8] sm:$0xff]
    %v136 = vld [vmem:[#allocation5 + $0x100] sm:$0xff]
    %v137 = vld [vmem:[#allocation5 + $0x108] sm:$0xff]
    %v138 = vld [vmem:[#allocation5 + $0x110] sm:$0xff]
    %v139 = vld [vmem:[#allocation5 + $0x118] sm:$0xff]
    %v140 = vld [vmem:[#allocation5 + $0x120] sm:$0xff]
    %v141 = vld [vmem:[#allocation5 + $0x128] sm:$0xff]
    %v142 = vld [vmem:[#allocation5 + $0x130] sm:$0xff]
    %v143 = vld [vmem:[#allocation5 + $0x138] sm:$0xff]
    %v144 = vld [vmem:[#allocation5 + $0x140] sm:$0xff]
    %v145 = vld [vmem:[#allocation5 + $0x148] sm:$0xff]
    %v146 = vld [vmem:[#allocation5 + $0x150] sm:$0xff]
    %v147 = vld [vmem:[#allocation5 + $0x158] sm:$0xff]
    %v148 = vld [vmem:[#allocation5 + $0x160] sm:$0xff]
    %v149 = vld [vmem:[#allocation5 + $0x168] sm:$0xff]
    %v150 = vld [vmem:[#allocation5 + $0x170] sm:$0xff]
    %v151 = vld [vmem:[#allocation5 + $0x178] sm:$0xff]
    %v152 = vld [vmem:[#allocation5 + $0x180] sm:$0xff]
    %v153 = vld [vmem:[#allocation5 + $0x188] sm:$0xff]
    %v154 = vld [vmem:[#allocation5 + $0x190] sm:$0xff]
    %v155 = vld [vmem:[#allocation5 + $0x198] sm:$0xff]
    %v156 = vld [vmem:[#allocation5 + $0x1a0] sm:$0xff]
    %v157 = vld [vmem:[#allocation5 + $0x1a8] sm:$0xff]
    %v158 = vld [vmem:[#allocation5 + $0x1b0] sm:$0xff]
    %v159 = vld [vmem:[#allocation5 + $0x1b8] sm:$0xff]
    %v160 = vld [vmem:[#allocation5 + $0x1c0] sm:$0xff]
    %v161 = vld [vmem:[#allocation5 + $0x1c8] sm:$0xff]
    %v162 = vld [vmem:[#allocation5 + $0x1d0] sm:$0xff]
    %v163 = vld [vmem:[#allocation5 + $0x1d8] sm:$0xff]
    %v164 = vld [vmem:[#allocation5 + $0x1e0] sm:$0xff]
    %v165 = vld [vmem:[#allocation5 + $0x1e8] sm:$0xff]
    %v166 = vld [vmem:[#allocation5 + $0x1f0] sm:$0xff]
    %v167 = vld [vmem:[#allocation5 + $0x1f8] sm:$0xff]
    %v168 = vld [vmem:[#allocation5 + $0x200] sm:$0xff]
    %v169 = vld [vmem:[#allocation5 + $0x208] sm:$0xff]
    %v170 = vld [vmem:[#allocation5 + $0x210] sm:$0xff]
    %v171 = vld [vmem:[#allocation5 + $0x218] sm:$0xff]
    %v172 = vld [vmem:[#allocation5 + $0x220] sm:$0xff]
    %v173 = vld [vmem:[#allocation5 + $0x228] sm:$0xff]
    %v174 = vld [vmem:[#allocation5 + $0x230] sm:$0xff]
    %v175 = vld [vmem:[#allocation5 + $0x238] sm:$0xff]
    %v176 = vld [vmem:[#allocation5 + $0x240] sm:$0xff]
    %v177 = vld [vmem:[#allocation5 + $0x248] sm:$0xff]
    %v178 = vld [vmem:[#allocation5 + $0x250] sm:$0xff]
    %v179 = vld [vmem:[#allocation5 + $0x258] sm:$0xff]
    %v180 = vld [vmem:[#allocation5 + $0x260] sm:$0xff]
    %v181 = vld [vmem:[#allocation5 + $0x268] sm:$0xff]
    %v182 = vld [vmem:[#allocation5 + $0x270] sm:$0xff]
    %v183 = vld [vmem:[#allocation5 + $0x278] sm:$0xff]
    %v184 = vld [vmem:[#allocation5 + $0x280] sm:$0xff]
    %v185 = vld [vmem:[#allocation5 + $0x288] sm:$0xff]
    %v186 = vld [vmem:[#allocation5 + $0x290] sm:$0xff]
    %v187 = vld [vmem:[#allocation5 + $0x298] sm:$0xff]
    %v188 = vld [vmem:[#allocation5 + $0x2a0] sm:$0xff]
    %v189 = vld [vmem:[#allocation5 + $0x2a8] sm:$0xff]
    %v190 = vld [vmem:[#allocation5 + $0x2b0] sm:$0xff]
    %v191 = vld [vmem:[#allocation5 + $0x2b8] sm:$0xff]
    %v192 = vld [vmem:[#allocation5 + $0x2c0] sm:$0xff]
    %v193 = vld [vmem:[#allocation5 + $0x2c8] sm:$0xff]
    %v194 = vld [vmem:[#allocation5 + $0x2d0] sm:$0xff]
    %v195 = vld [vmem:[#allocation5 + $0x2d8] sm:$0xff]
    %v196 = vld [vmem:[#allocation5 + $0x2e0] sm:$0xff]
    %v197 = vld [vmem:[#allocation5 + $0x2e8] sm:$0xff]
    %v198 = vld [vmem:[#allocation5 + $0x2f0] sm:$0xff]
    %v199 = vld [vmem:[#allocation5 + $0x2f8] sm:$0xff]
    %v264 = vunpack.c.l.b16 %v40
    %v265 = vunpack.c.h.b16 %v40
    %v266 = vunpack.c.l.b16 %v41
    %v267 = vunpack.c.h.b16 %v41
    %v268 = vunpack.c.l.b16 %v42
    %v269 = vunpack.c.h.b16 %v42
    %v270 = vunpack.c.l.b16 %v43
    %v271 = vunpack.c.h.b16 %v43
    %v272 = vunpack.c.l.b16 %v44
    %v273 = vunpack.c.h.b16 %v44
    %v274 = vunpack.c.l.b16 %v45
    %v275 = vunpack.c.h.b16 %v45
    %v276 = vunpack.c.l.b16 %v46
    %v277 = vunpack.c.h.b16 %v46
    %v278 = vunpack.c.l.b16 %v47
    %v279 = vunpack.c.h.b16 %v47
    %v280 = vunpack.c.l.b16 %v48
    %v281 = vunpack.c.h.b16 %v48
    %v282 = vunpack.c.l.b16 %v49
    %v283 = vunpack.c.h.b16 %v49
    %v284 = vunpack.c.l.b16 %v50
    %v285 = vunpack.c.h.b16 %v50
    %v286 = vunpack.c.l.b16 %v51
    %v287 = vunpack.c.h.b16 %v51
    %v288 = vunpack.c.l.b16 %v52
    %v289 = vunpack.c.h.b16 %v52
    %v290 = vunpack.c.l.b16 %v53
    %v291 = vunpack.c.h.b16 %v53
    %v292 = vunpack.c.l.b16 %v54
    %v293 = vunpack.c.h.b16 %v54
    %v294 = vunpack.c.l.b16 %v55
    %v295 = vunpack.c.h.b16 %v55
    %v296 = vunpack.c.l.b16 %v56
    %v297 = vunpack.c.h.b16 %v56
    %v298 = vunpack.c.l.b16 %v57
    %v299 = vunpack.c.h.b16 %v57
    %v300 = vunpack.c.l.b16 %v58
    %v301 = vunpack.c.h.b16 %v58
    %v302 = vunpack.c.l.b16 %v59
    %v303 = vunpack.c.h.b16 %v59
    %v304 = vunpack.c.l.b16 %v60
    %v305 = vunpack.c.h.b16 %v60
    %v306 = vunpack.c.l.b16 %v61
    %v307 = vunpack.c.h.b16 %v61
    %v308 = vunpack.c.l.b16 %v62
    %v309 = vunpack.c.h.b16 %v62
    %v310 = vunpack.c.l.b16 %v63
    %v311 = vunpack.c.h.b16 %v63
    %v312 = vunpack.c.l.b16 %v64
    %v313 = vunpack.c.h.b16 %v64
    %v314 = vunpack.c.l.b16 %v65
    %v315 = vunpack.c.h.b16 %v65
    %v316 = vunpack.c.l.b16 %v66
    %v317 = vunpack.c.h.b16 %v66
    %v318 = vunpack.c.l.b16 %v67
    %v319 = vunpack.c.h.b16 %v67
    %v320 = vunpack.c.l.b16 %v68
    %v321 = vunpack.c.h.b16 %v68
    %v322 = vunpack.c.l.b16 %v69
    %v323 = vunpack.c.h.b16 %v69
    %v324 = vunpack.c.l.b16 %v70
    %v325 = vunpack.c.h.b16 %v70
    %v326 = vunpack.c.l.b16 %v71
    %v327 = vunpack.c.h.b16 %v71
    %v328 = vunpack.c.l.b16 %v72
    %v329 = vunpack.c.h.b16 %v72
    %v330 = vunpack.c.l.b16 %v73
    %v331 = vunpack.c.h.b16 %v73
    %v332 = vunpack.c.l.b16 %v74
    %v333 = vunpack.c.h.b16 %v74
    %v334 = vunpack.c.l.b16 %v75
    %v335 = vunpack.c.h.b16 %v75
    %v336 = vunpack.c.l.b16 %v76
    %v337 = vunpack.c.h.b16 %v76
    %v338 = vunpack.c.l.b16 %v77
    %v339 = vunpack.c.h.b16 %v77
    %v340 = vunpack.c.l.b16 %v78
    %v341 = vunpack.c.h.b16 %v78
    %v342 = vunpack.c.l.b16 %v79
    %v343 = vunpack.c.h.b16 %v79
    %v344 = vunpack.c.l.b16 %v80
    %v345 = vunpack.c.h.b16 %v80
    %v346 = vunpack.c.l.b16 %v81
    %v347 = vunpack.c.h.b16 %v81
    %v348 = vunpack.c.l.b16 %v82
    %v349 = vunpack.c.h.b16 %v82
    %v350 = vunpack.c.l.b16 %v83
    %v351 = vunpack.c.h.b16 %v83
    %v352 = vunpack.c.l.b16 %v84
    %v353 = vunpack.c.h.b16 %v84
    %v354 = vunpack.c.l.b16 %v85
    %v355 = vunpack.c.h.b16 %v85
    %v356 = vunpack.c.l.b16 %v86
    %v357 = vunpack.c.h.b16 %v86
    %v358 = vunpack.c.l.b16 %v87
    %v359 = vunpack.c.h.b16 %v87
    %v360 = vunpack.c.l.b16 %v88
    %v361 = vunpack.c.h.b16 %v88
    %v362 = vunpack.c.l.b16 %v89
    %v363 = vunpack.c.h.b16 %v89
    %v364 = vunpack.c.l.b16 %v90
    %v365 = vunpack.c.h.b16 %v90
    %v366 = vunpack.c.l.b16 %v91
    %v367 = vunpack.c.h.b16 %v91
    %v368 = vunpack.c.l.b16 %v92
    %v369 = vunpack.c.h.b16 %v92
    %v370 = vunpack.c.l.b16 %v93
    %v371 = vunpack.c.h.b16 %v93
    %v372 = vunpack.c.l.b16 %v94
    %v373 = vunpack.c.h.b16 %v94
    %v374 = vunpack.c.l.b16 %v95
    %v375 = vunpack.c.h.b16 %v95
    %v376 = vunpack.c.l.b16 %v96
    %v377 = vunpack.c.h.b16 %v96
    %v378 = vunpack.c.l.b16 %v97
    %v379 = vunpack.c.h.b16 %v97
    %v380 = vunpack.c.l.b16 %v98
    %v381 = vunpack.c.h.b16 %v98
    %v382 = vunpack.c.l.b16 %v99
    %v383 = vunpack.c.h.b16 %v99
    %v384 = vunpack.c.l.b16 %v100
    %v385 = vunpack.c.h.b16 %v100
    %v386 = vunpack.c.l.b16 %v101
    %v387 = vunpack.c.h.b16 %v101
    %v388 = vunpack.c.l.b16 %v102
    %v389 = vunpack.c.h.b16 %v102
    %v390 = vunpack.c.l.b16 %v103
    %v391 = vunpack.c.h.b16 %v103
    %v392 = vpack.c.b16 %v266, %v264
    %v393 = vpack.c.b16 %v267, %v265
    %v394 = vpack.c.b16 %v270, %v268
    %v395 = vpack.c.b16 %v271, %v269
    %v396 = vpack.c.b16 %v274, %v272
    %v397 = vpack.c.b16 %v275, %v273
    %v398 = vpack.c.b16 %v278, %v276
    %v399 = vpack.c.b16 %v279, %v277
    %v400 = vpack.c.b16 %v282, %v280
    %v401 = vpack.c.b16 %v283, %v281
    %v402 = vpack.c.b16 %v286, %v284
    %v403 = vpack.c.b16 %v287, %v285
    %v404 = vpack.c.b16 %v290, %v288
    %v405 = vpack.c.b16 %v291, %v289
    %v406 = vpack.c.b16 %v294, %v292
    %v407 = vpack.c.b16 %v295, %v293
    %v408 = vpack.c.b16 %v298, %v296
    %v409 = vpack.c.b16 %v299, %v297
    %v410 = vpack.c.b16 %v302, %v300
    %v411 = vpack.c.b16 %v303, %v301
    %v412 = vpack.c.b16 %v306, %v304
    %v413 = vpack.c.b16 %v307, %v305
    %v414 = vpack.c.b16 %v310, %v308
    %v415 = vpack.c.b16 %v311, %v309
    %v416 = vpack.c.b16 %v314, %v312
    %v417 = vpack.c.b16 %v315, %v313
    %v418 = vpack.c.b16 %v318, %v316
    %v419 = vpack.c.b16 %v319, %v317
    %v420 = vpack.c.b16 %v322, %v320
    %v421 = vpack.c.b16 %v323, %v321
    %v422 = vpack.c.b16 %v326, %v324
    %v423 = vpack.c.b16 %v327, %v325
    %v424 = vpack.c.b16 %v330, %v328
    %v425 = vpack.c.b16 %v331, %v329
    %v426 = vpack.c.b16 %v334, %v332
    %v427 = vpack.c.b16 %v335, %v333
    %v428 = vpack.c.b16 %v338, %v336
    %v429 = vpack.c.b16 %v339, %v337
    %v430 = vpack.c.b16 %v342, %v340
    %v431 = vpack.c.b16 %v343, %v341
    %v432 = vpack.c.b16 %v346, %v344
    %v433 = vpack.c.b16 %v347, %v345
    %v434 = vpack.c.b16 %v350, %v348
    %v435 = vpack.c.b16 %v351, %v349
    %v436 = vpack.c.b16 %v354, %v352
    %v437 = vpack.c.b16 %v355, %v353
    %v438 = vpack.c.b16 %v358, %v356
    %v439 = vpack.c.b16 %v359, %v357
    %v440 = vpack.c.b16 %v362, %v360
    %v441 = vpack.c.b16 %v363, %v361
    %v442 = vpack.c.b16 %v366, %v364
    %v443 = vpack.c.b16 %v367, %v365
    %v444 = vpack.c.b16 %v370, %v368
    %v445 = vpack.c.b16 %v371, %v369
    %v446 = vpack.c.b16 %v374, %v372
    %v447 = vpack.c.b16 %v375, %v373
    %v448 = vpack.c.b16 %v378, %v376
    %v449 = vpack.c.b16 %v379, %v377
    %v450 = vpack.c.b16 %v382, %v380
    %v451 = vpack.c.b16 %v383, %v381
    %v452 = vpack.c.b16 %v386, %v384
    %v453 = vpack.c.b16 %v387, %v385
    %v454 = vpack.c.b16 %v390, %v388
    %v455 = vpack.c.b16 %v391, %v389
    %v616 = vunpack.c.l.b16 %v104
    %v617 = vunpack.c.h.b16 %v104
    %v618 = vunpack.c.l.b16 %v105
    %v619 = vunpack.c.h.b16 %v105
    %v620 = vunpack.c.l.b16 %v106
    %v621 = vunpack.c.h.b16 %v106
    %v622 = vunpack.c.l.b16 %v107
    %v623 = vunpack.c.h.b16 %v107
    %v624 = vunpack.c.l.b16 %v108
    %v625 = vunpack.c.h.b16 %v108
    %v626 = vunpack.c.l.b16 %v109
    %v627 = vunpack.c.h.b16 %v109
    %v628 = vunpack.c.l.b16 %v110
    %v629 = vunpack.c.h.b16 %v110
    %v630 = vunpack.c.l.b16 %v111
    %v631 = vunpack.c.h.b16 %v111
    %v632 = vunpack.c.l.b16 %v112
    %v633 = vunpack.c.h.b16 %v112
    %v634 = vunpack.c.l.b16 %v113
    %v635 = vunpack.c.h.b16 %v113
    %v636 = vunpack.c.l.b16 %v114
    %v637 = vunpack.c.h.b16 %v114
    %v638 = vunpack.c.l.b16 %v115
    %v639 = vunpack.c.h.b16 %v115
    %v640 = vunpack.c.l.b16 %v116
    %v641 = vunpack.c.h.b16 %v116
    %v642 = vunpack.c.l.b16 %v117
    %v643 = vunpack.c.h.b16 %v117
    %v644 = vunpack.c.l.b16 %v118
    %v645 = vunpack.c.h.b16 %v118
    %v646 = vunpack.c.l.b16 %v119
    %v647 = vunpack.c.h.b16 %v119
    %v648 = vunpack.c.l.b16 %v120
    %v649 = vunpack.c.h.b16 %v120
    %v650 = vunpack.c.l.b16 %v121
    %v651 = vunpack.c.h.b16 %v121
    %v652 = vunpack.c.l.b16 %v122
    %v653 = vunpack.c.h.b16 %v122
    %v654 = vunpack.c.l.b16 %v123
    %v655 = vunpack.c.h.b16 %v123
    %v656 = vunpack.c.l.b16 %v124
    %v657 = vunpack.c.h.b16 %v124
    %v658 = vunpack.c.l.b16 %v125
    %v659 = vunpack.c.h.b16 %v125
    %v660 = vunpack.c.l.b16 %v126
    %v661 = vunpack.c.h.b16 %v126
    %v662 = vunpack.c.l.b16 %v127
    %v663 = vunpack.c.h.b16 %v127
    %v664 = vunpack.c.l.b16 %v128
    %v665 = vunpack.c.h.b16 %v128
    %v666 = vunpack.c.l.b16 %v129
    %v667 = vunpack.c.h.b16 %v129
    %v668 = vunpack.c.l.b16 %v130
    %v669 = vunpack.c.h.b16 %v130
    %v670 = vunpack.c.l.b16 %v131
    %v671 = vunpack.c.h.b16 %v131
    %v672 = vunpack.c.l.b16 %v132
    %v673 = vunpack.c.h.b16 %v132
    %v674 = vunpack.c.l.b16 %v133
    %v675 = vunpack.c.h.b16 %v133
    %v676 = vunpack.c.l.b16 %v134
    %v677 = vunpack.c.h.b16 %v134
    %v678 = vunpack.c.l.b16 %v135
    %v679 = vunpack.c.h.b16 %v135
    %v680 = vunpack.c.l.b16 %v136
    %v681 = vunpack.c.h.b16 %v136
    %v682 = vunpack.c.l.b16 %v137
    %v683 = vunpack.c.h.b16 %v137
    %v684 = vunpack.c.l.b16 %v138
    %v685 = vunpack.c.h.b16 %v138
    %v686 = vunpack.c.l.b16 %v139
    %v687 = vunpack.c.h.b16 %v139
    %v688 = vunpack.c.l.b16 %v140
    %v689 = vunpack.c.h.b16 %v140
    %v690 = vunpack.c.l.b16 %v141
    %v691 = vunpack.c.h.b16 %v141
    %v692 = vunpack.c.l.b16 %v142
    %v693 = vunpack.c.h.b16 %v142
    %v694 = vunpack.c.l.b16 %v143
    %v695 = vunpack.c.h.b16 %v143
    %v696 = vunpack.c.l.b16 %v144
    %v697 = vunpack.c.h.b16 %v144
    %v698 = vunpack.c.l.b16 %v145
    %v699 = vunpack.c.h.b16 %v145
    %v700 = vunpack.c.l.b16 %v146
    %v701 = vunpack.c.h.b16 %v146
    %v702 = vunpack.c.l.b16 %v147
    %v703 = vunpack.c.h.b16 %v147
    %v704 = vunpack.c.l.b16 %v148
    %v705 = vunpack.c.h.b16 %v148
    %v706 = vunpack.c.l.b16 %v149
    %v707 = vunpack.c.h.b16 %v149
    %v708 = vunpack.c.l.b16 %v150
    %v709 = vunpack.c.h.b16 %v150
    %v710 = vunpack.c.l.b16 %v151
    %v711 = vunpack.c.h.b16 %v151
    %v712 = vunpack.c.l.b16 %v152
    %v713 = vunpack.c.h.b16 %v152
    %v714 = vunpack.c.l.b16 %v153
    %v715 = vunpack.c.h.b16 %v153
    %v716 = vunpack.c.l.b16 %v154
    %v717 = vunpack.c.h.b16 %v154
    %v718 = vunpack.c.l.b16 %v155
    %v719 = vunpack.c.h.b16 %v155
    %v720 = vunpack.c.l.b16 %v156
    %v721 = vunpack.c.h.b16 %v156
    %v722 = vunpack.c.l.b16 %v157
    %v723 = vunpack.c.h.b16 %v157
    %v724 = vunpack.c.l.b16 %v158
    %v725 = vunpack.c.h.b16 %v158
    %v726 = vunpack.c.l.b16 %v159
    %v727 = vunpack.c.h.b16 %v159
    %v728 = vunpack.c.l.b16 %v160
    %v729 = vunpack.c.h.b16 %v160
    %v730 = vunpack.c.l.b16 %v161
    %v731 = vunpack.c.h.b16 %v161
    %v732 = vunpack.c.l.b16 %v162
    %v733 = vunpack.c.h.b16 %v162
    %v734 = vunpack.c.l.b16 %v163
    %v735 = vunpack.c.h.b16 %v163
    %v736 = vunpack.c.l.b16 %v164
    %v737 = vunpack.c.h.b16 %v164
    %v738 = vunpack.c.l.b16 %v165
    %v739 = vunpack.c.h.b16 %v165
    %v740 = vunpack.c.l.b16 %v166
    %v741 = vunpack.c.h.b16 %v166
    %v742 = vunpack.c.l.b16 %v167
    %v743 = vunpack.c.h.b16 %v167
    %v744 = vunpack.c.l.b16 %v168
    %v745 = vunpack.c.h.b16 %v168
    %v746 = vunpack.c.l.b16 %v169
    %v747 = vunpack.c.h.b16 %v169
    %v748 = vunpack.c.l.b16 %v170
    %v749 = vunpack.c.h.b16 %v170
    %v750 = vunpack.c.l.b16 %v171
    %v751 = vunpack.c.h.b16 %v171
    %v752 = vunpack.c.l.b16 %v172
    %v753 = vunpack.c.h.b16 %v172
    %v754 = vunpack.c.l.b16 %v173
    %v755 = vunpack.c.h.b16 %v173
    %v756 = vunpack.c.l.b16 %v174
    %v757 = vunpack.c.h.b16 %v174
    %v758 = vunpack.c.l.b16 %v175
    %v759 = vunpack.c.h.b16 %v175
    %v760 = vunpack.c.l.b16 %v176
    %v761 = vunpack.c.h.b16 %v176
    %v762 = vunpack.c.l.b16 %v177
    %v763 = vunpack.c.h.b16 %v177
    %v764 = vunpack.c.l.b16 %v178
    %v765 = vunpack.c.h.b16 %v178
    %v766 = vunpack.c.l.b16 %v179
    %v767 = vunpack.c.h.b16 %v179
    %v768 = vunpack.c.l.b16 %v180
    %v769 = vunpack.c.h.b16 %v180
    %v770 = vunpack.c.l.b16 %v181
    %v771 = vunpack.c.h.b16 %v181
    %v772 = vunpack.c.l.b16 %v182
    %v773 = vunpack.c.h.b16 %v182
    %v774 = vunpack.c.l.b16 %v183
    %v775 = vunpack.c.h.b16 %v183
    %v776 = vunpack.c.l.b16 %v184
    %v777 = vunpack.c.h.b16 %v184
    %v778 = vunpack.c.l.b16 %v185
    %v779 = vunpack.c.h.b16 %v185
    %v780 = vunpack.c.l.b16 %v186
    %v781 = vunpack.c.h.b16 %v186
    %v782 = vunpack.c.l.b16 %v187
    %v783 = vunpack.c.h.b16 %v187
    %v784 = vunpack.c.l.b16 %v188
    %v785 = vunpack.c.h.b16 %v188
    %v786 = vunpack.c.l.b16 %v189
    %v787 = vunpack.c.h.b16 %v189
    %v788 = vunpack.c.l.b16 %v190
    %v789 = vunpack.c.h.b16 %v190
    %v790 = vunpack.c.l.b16 %v191
    %v791 = vunpack.c.h.b16 %v191
    %v792 = vunpack.c.l.b16 %v192
    %v793 = vunpack.c.h.b16 %v192
    %v794 = vunpack.c.l.b16 %v193
    %v795 = vunpack.c.h.b16 %v193
    %v796 = vunpack.c.l.b16 %v194
    %v797 = vunpack.c.h.b16 %v194
    %v798 = vunpack.c.l.b16 %v195
    %v799 = vunpack.c.h.b16 %v195
    %v800 = vunpack.c.l.b16 %v196
    %v801 = vunpack.c.h.b16 %v196
    %v802 = vunpack.c.l.b16 %v197
    %v803 = vunpack.c.h.b16 %v197
    %v804 = vunpack.c.l.b16 %v198
    %v805 = vunpack.c.h.b16 %v198
    %v806 = vunpack.c.l.b16 %v199
    %v807 = vunpack.c.h.b16 %v199
    %v808 = vpack.c.b16 %v622, %v616
    %v809 = vpack.c.b16 %v623, %v617
    %v810 = vpack.c.b16 %v624, %v618
    %v811 = vpack.c.b16 %v625, %v619
    %v812 = vpack.c.b16 %v626, %v620
    %v813 = vpack.c.b16 %v627, %v621
    %v814 = vpack.c.b16 %v634, %v628
    %v815 = vpack.c.b16 %v635, %v629
    %v816 = vpack.c.b16 %v636, %v630
    %v817 = vpack.c.b16 %v637, %v631
    %v818 = vpack.c.b16 %v638, %v632
    %v819 = vpack.c.b16 %v639, %v633
    %v820 = vpack.c.b16 %v646, %v640
    %v821 = vpack.c.b16 %v647, %v641
    %v822 = vpack.c.b16 %v648, %v642
    %v823 = vpack.c.b16 %v649, %v643
    %v824 = vpack.c.b16 %v650, %v644
    %v825 = vpack.c.b16 %v651, %v645
    %v826 = vpack.c.b16 %v658, %v652
    %v827 = vpack.c.b16 %v659, %v653
    %v828 = vpack.c.b16 %v660, %v654
    %v829 = vpack.c.b16 %v661, %v655
    %v830 = vpack.c.b16 %v662, %v656
    %v831 = vpack.c.b16 %v663, %v657
    %v832 = vpack.c.b16 %v670, %v664
    %v833 = vpack.c.b16 %v671, %v665
    %v834 = vpack.c.b16 %v672, %v666
    %v835 = vpack.c.b16 %v673, %v667
    %v836 = vpack.c.b16 %v674, %v668
    %v837 = vpack.c.b16 %v675, %v669
    %v838 = vpack.c.b16 %v682, %v676
    %v839 = vpack.c.b16 %v683, %v677
    %v840 = vpack.c.b16 %v684, %v678
    %v841 = vpack.c.b16 %v685, %v679
    %v842 = vpack.c.b16 %v686, %v680
    %v843 = vpack.c.b16 %v687, %v681
    %v844 = vpack.c.b16 %v694, %v688
    %v845 = vpack.c.b16 %v695, %v689
    %v846 = vpack.c.b16 %v696, %v690
    %v847 = vpack.c.b16 %v697, %v691
    %v848 = vpack.c.b16 %v698, %v692
    %v849 = vpack.c.b16 %v699, %v693
    %v850 = vpack.c.b16 %v706, %v700
    %v851 = vpack.c.b16 %v707, %v701
    %v852 = vpack.c.b16 %v708, %v702
    %v853 = vpack.c.b16 %v709, %v703
    %v854 = vpack.c.b16 %v710, %v704
    %v855 = vpack.c.b16 %v711, %v705
    %v856 = vpack.c.b16 %v718, %v712
    %v857 = vpack.c.b16 %v719, %v713
    %v858 = vpack.c.b16 %v720, %v714
    %v859 = vpack.c.b16 %v721, %v715
    %v860 = vpack.c.b16 %v722, %v716
    %v861 = vpack.c.b16 %v723, %v717
    %v862 = vpack.c.b16 %v730, %v724
    %v863 = vpack.c.b16 %v731, %v725
    %v864 = vpack.c.b16 %v732, %v726
    %v865 = vpack.c.b16 %v733, %v727
    %v866 = vpack.c.b16 %v734, %v728
    %v867 = vpack.c.b16 %v735, %v729
    %v868 = vpack.c.b16 %v742, %v736
    %v869 = vpack.c.b16 %v743, %v737
    %v870 = vpack.c.b16 %v744, %v738
    %v871 = vpack.c.b16 %v745, %v739
    %v872 = vpack.c.b16 %v746, %v740
    %v873 = vpack.c.b16 %v747, %v741
    %v874 = vpack.c.b16 %v754, %v748
    %v875 = vpack.c.b16 %v755, %v749
    %v876 = vpack.c.b16 %v756, %v750
    %v877 = vpack.c.b16 %v757, %v751
    %v878 = vpack.c.b16 %v758, %v752
    %v879 = vpack.c.b16 %v759, %v753
    %v880 = vpack.c.b16 %v766, %v760
    %v881 = vpack.c.b16 %v767, %v761
    %v882 = vpack.c.b16 %v768, %v762
    %v883 = vpack.c.b16 %v769, %v763
    %v884 = vpack.c.b16 %v770, %v764
    %v885 = vpack.c.b16 %v771, %v765
    %v886 = vpack.c.b16 %v778, %v772
    %v887 = vpack.c.b16 %v779, %v773
    %v888 = vpack.c.b16 %v780, %v774
    %v889 = vpack.c.b16 %v781, %v775
    %v890 = vpack.c.b16 %v782, %v776
    %v891 = vpack.c.b16 %v783, %v777
    %v892 = vpack.c.b16 %v790, %v784
    %v893 = vpack.c.b16 %v791, %v785
    %v894 = vpack.c.b16 %v792, %v786
    %v895 = vpack.c.b16 %v793, %v787
    %v896 = vpack.c.b16 %v794, %v788
    %v897 = vpack.c.b16 %v795, %v789
    %v898 = vpack.c.b16 %v802, %v796
    %v899 = vpack.c.b16 %v803, %v797
    %v900 = vpack.c.b16 %v804, %v798
    %v901 = vpack.c.b16 %v805, %v799
    %v902 = vpack.c.b16 %v806, %v800
    %v903 = vpack.c.b16 %v807, %v801
    %1000 = vmatprep.subr.bf16.mxu0 %v809
    %1001 = vmatpush1.bf16.msra.mxu0 %v808
    %1002 = vmatprep.subr.bf16.mxu0 %v815
    %1003 = vmatpush1.bf16.msra.mxu0 %v814
    %1004 = vmatprep.subr.bf16.mxu0 %v821
    %1005 = vmatpush1.bf16.msra.mxu0 %v820
    %1006 = vmatprep.subr.bf16.mxu0 %v827
    %1007 = vmatpush1.bf16.msra.mxu0 %v826
    %1008 = vmatprep.subr.bf16.mxu0 %v833
    %1009 = vmatpush1.bf16.msra.mxu0 %v832
    %1010 = vmatprep.subr.bf16.mxu0 %v839
    %1011 = vmatpush1.bf16.msra.mxu0 %v838
    %1012 = vmatprep.subr.bf16.mxu0 %v845
    %1013 = vmatpush1.bf16.msra.mxu0 %v844
    %1014 = vmatprep.subr.bf16.mxu0 %v851
    %1015 = vmatpush1.bf16.msra.mxu0 %v850
    %1016 = vmatprep.subr.bf16.mxu0 %v857
    %1017 = vmatpush1.bf16.msra.mxu0 %v856
    %1018 = vmatprep.subr.bf16.mxu0 %v863
    %1019 = vmatpush1.bf16.msra.mxu0 %v862
    %1020 = vmatprep.subr.bf16.mxu0 %v869
    %1021 = vmatpush1.bf16.msra.mxu0 %v868
    %1022 = vmatprep.subr.bf16.mxu0 %v875
    %1023 = vmatpush1.bf16.msra.mxu0 %v874
    %1024 = vmatprep.subr.bf16.mxu0 %v881
    %1025 = vmatpush1.bf16.msra.mxu0 %v880
    %1026 = vmatprep.subr.bf16.mxu0 %v887
    %1027 = vmatpush1.bf16.msra.mxu0 %v886
    %1028 = vmatprep.subr.bf16.mxu0 %v893
    %1029 = vmatpush1.bf16.msra.mxu0 %v892
    %1030 = vmatprep.subr.bf16.mxu0 %v899
    %1031 = vmatpush1.bf16.msra.mxu0 %v898
    %1032 = vmatprep.mubr.bf16.mxu0 %v393
    %1033 = vmatmul.mubr.bf16.gmra.mrb[0].mxu0 %v392
    %v1034 = vpop.f32.mrb[0].mxu0
    %v1035 = vadd.f32 0.0, %v1034
    %v1036 = vpop.f32.mrb[0].mxu0
    %v1037 = vadd.f32 0.0, %v1036
    %v1038 = vpop.f32.mrb[0].mxu0
    %v1039 = vadd.f32 0.0, %v1038
    %v1040 = vpop.f32.mrb[0].mxu0
    %v1041 = vadd.f32 0.0, %v1040
    %1042 = vmatprep.mubr.bf16.mxu0 %v395
    %1043 = vmatmul.mubr.bf16.gmra.mrb[0].mxu0 %v394
    %v1044 = vpop.f32.mrb[0].mxu0
    %v1045 = vadd.f32 0.0, %v1044
    %v1046 = vpop.f32.mrb[0].mxu0
    %v1047 = vadd.f32 0.0, %v1046
    %v1048 = vpop.f32.mrb[0].mxu0
    %v1049 = vadd.f32 0.0, %v1048
    %v1050 = vpop.f32.mrb[0].mxu0
    %v1051 = vadd.f32 0.0, %v1050
    %1052 = vmatprep.mubr.bf16.mxu0 %v397
    %1053 = vmatmul.mubr.bf16.gmra.mrb[0].mxu0 %v396
    %v1054 = vpop.f32.mrb[0].mxu0
    %v1055 = vadd.f32 0.0, %v1054
    %v1056 = vpop.f32.mrb[0].mxu0
    %v1057 = vadd.f32 0.0, %v1056
    %v1058 = vpop.f32.mrb[0].mxu0
    %v1059 = vadd.f32 0.0, %v1058
    %v1060 = vpop.f32.mrb[0].mxu0
    %v1061 = vadd.f32 0.0, %v1060
    %1062 = vmatprep.mubr.bf16.mxu0 %v399
    %1063 = vmatmul.mubr.bf16.gmra.mrb[0].mxu0 %v398
    %v1064 = vpop.f32.mrb[0].mxu0
    %v1065 = vadd.f32 0.0, %v1064
    %v1066 = vpop.f32.mrb[0].mxu0
    %v1067 = vadd.f32 0.0, %v1066
    %v1068 = vpop.f32.mrb[0].mxu0
    %v1069 = vadd.f32 0.0, %v1068
    %v1070 = vpop.f32.mrb[0].mxu0
    %v1071 = vadd.f32 0.0, %v1070
    %1072 = vmatprep.mubr.bf16.mxu0 %v401
    %1073 = vmatmul.mubr.bf16.gmra.mrb[0].mxu0 %v400
    %v1074 = vpop.f32.mrb[0].mxu0
    %v1075 = vadd.f32 0.0, %v1074
    %v1076 = vpop.f32.mrb[0].mxu0
    %v1077 = vadd.f32 0.0, %v1076
    %v1078 = vpop.f32.mrb[0].mxu0
    %v1079 = vadd.f32 0.0, %v1078
    %v1080 = vpop.f32.mrb[0].mxu0
    %v1081 = vadd.f32 0.0, %v1080
    %1082 = vmatprep.mubr.bf16.mxu0 %v403
    %1083 = vmatmul.mubr.bf16.gmra.mrb[0].mxu0 %v402
    %v1084 = vpop.f32.mrb[0].mxu0
    %v1085 = vadd.f32 0.0, %v1084
    %v1086 = vpop.f32.mrb[0].mxu0
    %v1087 = vadd.f32 0.0, %v1086
    %v1088 = vpop.f32.mrb[0].mxu0
    %v1089 = vadd.f32 0.0, %v1088
    %v1090 = vpop.f32.mrb[0].mxu0
    %v1091 = vadd.f32 0.0, %v1090
    %1092 = vmatprep.mubr.bf16.mxu0 %v405
    %1093 = vmatmul.mubr.bf16.gmra.mrb[0].mxu0 %v404
    %v1094 = vpop.f32.mrb[0].mxu0
    %v1095 = vadd.f32 0.0, %v1094
    %v1096 = vpop.f32.mrb[0].mxu0
    %v1097 = vadd.f32 0.0, %v1096
    %v1098 = vpop.f32.mrb[0].mxu0
    %v1099 = vadd.f32 0.0, %v1098
    %v1100 = vpop.f32.mrb[0].mxu0
    %v1101 = vadd.f32 0.0, %v1100
    %1102 = vmatprep.mubr.bf16.mxu0 %v407
    %1103 = vmatmul.mubr.bf16.gmra.mrb[0].mxu0 %v406
    %v1104 = vpop.f32.mrb[0].mxu0
    %v1105 = vadd.f32 0.0, %v1104
    %v1106 = vpop.f32.mrb[0].mxu0
    %v1107 = vadd.f32 0.0, %v1106
    %v1108 = vpop.f32.mrb[0].mxu0
    %v1109 = vadd.f32 0.0, %v1108
    %v1110 = vpop.f32.mrb[0].mxu0
    %v1111 = vadd.f32 0.0, %v1110
    %1112 = vmatprep.mubr.bf16.mxu0 %v409
    %1113 = vmatmul.mubr.bf16.gmra.mrb[0].mxu0 %v408
    %v1114 = vpop.f32.mrb[0].mxu0
    %v1115 = vadd.f32 0.0, %v1114
    %v1116 = vpop.f32.mrb[0].mxu0
    %v1117 = vadd.f32 0.0, %v1116
    %v1118 = vpop.f32.mrb[0].mxu0
    %v1119 = vadd.f32 0.0, %v1118
    %v1120 = vpop.f32.mrb[0].mxu0
    %v1121 = vadd.f32 0.0, %v1120
    %1122 = vmatprep.mubr.bf16.mxu0 %v411
    %1123 = vmatmul.mubr.bf16.gmra.mrb[0].mxu0 %v410
    %v1124 = vpop.f32.mrb[0].mxu0
    %v1125 = vadd.f32 0.0, %v1124
    %v1126 = vpop.f32.mrb[0].mxu0
    %v1127 = vadd.f32 0.0, %v1126
    %v1128 = vpop.f32.mrb[0].mxu0
    %v1129 = vadd.f32 0.0, %v1128
    %v1130 = vpop.f32.mrb[0].mxu0
    %v1131 = vadd.f32 0.0, %v1130
    %1132 = vmatprep.mubr.bf16.mxu0 %v413
    %1133 = vmatmul.mubr.bf16.gmra.mrb[0].mxu0 %v412
    %v1134 = vpop.f32.mrb[0].mxu0
    %v1135 = vadd.f32 0.0, %v1134
    %v1136 = vpop.f32.mrb[0].mxu0
    %v1137 = vadd.f32 0.0, %v1136
    %v1138 = vpop.f32.mrb[0].mxu0
    %v1139 = vadd.f32 0.0, %v1138
    %v1140 = vpop.f32.mrb[0].mxu0
    %v1141 = vadd.f32 0.0, %v1140
    %1142 = vmatprep.mubr.bf16.mxu0 %v415
    %1143 = vmatmul.mubr.bf16.gmra.mrb[0].mxu0 %v414
    %v1144 = vpop.f32.mrb[0].mxu0
    %v1145 = vadd.f32 0.0, %v1144
    %v1146 = vpop.f32.mrb[0].mxu0
    %v1147 = vadd.f32 0.0, %v1146
    %v1148 = vpop.f32.mrb[0].mxu0
    %v1149 = vadd.f32 0.0, %v1148
    %v1150 = vpop.f32.mrb[0].mxu0
    %v1151 = vadd.f32 0.0, %v1150
    %1152 = vmatprep.mubr.bf16.mxu0 %v417
    %1153 = vmatmul.mubr.bf16.gmra.mrb[0].mxu0 %v416
    %v1154 = vpop.f32.mrb[0].mxu0
    %v1155 = vadd.f32 0.0, %v1154
    %v1156 = vpop.f32.mrb[0].mxu0
    %v1157 = vadd.f32 0.0, %v1156
    %v1158 = vpop.f32.mrb[0].mxu0
    %v1159 = vadd.f32 0.0, %v1158
    %v1160 = vpop.f32.mrb[0].mxu0
    %v1161 = vadd.f32 0.0, %v1160
    %1162 = vmatprep.mubr.bf16.mxu0 %v419
    %1163 = vmatmul.mubr.bf16.gmra.mrb[0].mxu0 %v418
    %v1164 = vpop.f32.mrb[0].mxu0
    %v1165 = vadd.f32 0.0, %v1164
    %v1166 = vpop.f32.mrb[0].mxu0
    %v1167 = vadd.f32 0.0, %v1166
    %v1168 = vpop.f32.mrb[0].mxu0
    %v1169 = vadd.f32 0.0, %v1168
    %v1170 = vpop.f32.mrb[0].mxu0
    %v1171 = vadd.f32 0.0, %v1170
    %1172 = vmatprep.mubr.bf16.mxu0 %v421
    %1173 = vmatmul.mubr.bf16.gmra.mrb[0].mxu0 %v420
    %v1174 = vpop.f32.mrb[0].mxu0
    %v1175 = vadd.f32 0.0, %v1174
    %v1176 = vpop.f32.mrb[0].mxu0
    %v1177 = vadd.f32 0.0, %v1176
    %v1178 = vpop.f32.mrb[0].mxu0
    %v1179 = vadd.f32 0.0, %v1178
    %v1180 = vpop.f32.mrb[0].mxu0
    %v1181 = vadd.f32 0.0, %v1180
    %1182 = vmatprep.mubr.bf16.mxu0 %v423
    %1183 = vmatmul.mubr.bf16.gmra.mrb[0].mxu0 %v422
    %v1184 = vpop.f32.mrb[0].mxu0
    %v1185 = vadd.f32 0.0, %v1184
    %v1186 = vpop.f32.mrb[0].mxu0
    %v1187 = vadd.f32 0.0, %v1186
    %v1188 = vpop.f32.mrb[0].mxu0
    %v1189 = vadd.f32 0.0, %v1188
    %v1190 = vpop.f32.mrb[0].mxu0
    %v1191 = vadd.f32 0.0, %v1190
    %1192 = vmatprep.mubr.bf16.mxu0 %v425
    %1193 = vmatmul.mubr.bf16.gmra.mrb[0].mxu0 %v424
    %v1194 = vpop.f32.mrb[0].mxu0
    %v1195 = vadd.f32 0.0, %v1194
    %v1196 = vpop.f32.mrb[0].mxu0
    %v1197 = vadd.f32 0.0, %v1196
    %v1198 = vpop.f32.mrb[0].mxu0
    %v1199 = vadd.f32 0.0, %v1198
    %v1200 = vpop.f32.mrb[0].mxu0
    %v1201 = vadd.f32 0.0, %v1200
    %1202 = vmatprep.mubr.bf16.mxu0 %v427
    %1203 = vmatmul.mubr.bf16.gmra.mrb[0].mxu0 %v426
    %v1204 = vpop.f32.mrb[0].mxu0
    %v1205 = vadd.f32 0.0, %v1204
    %v1206 = vpop.f32.mrb[0].mxu0
    %v1207 = vadd.f32 0.0, %v1206
    %v1208 = vpop.f32.mrb[0].mxu0
    %v1209 = vadd.f32 0.0, %v1208
    %v1210 = vpop.f32.mrb[0].mxu0
    %v1211 = vadd.f32 0.0, %v1210
    %1212 = vmatprep.mubr.bf16.mxu0 %v429
    %1213 = vmatmul.mubr.bf16.gmra.mrb[0].mxu0 %v428
    %v1214 = vpop.f32.mrb[0].mxu0
    %v1215 = vadd.f32 0.0, %v1214
    %v1216 = vpop.f32.mrb[0].mxu0
    %v1217 = vadd.f32 0.0, %v1216
    %v1218 = vpop.f32.mrb[0].mxu0
    %v1219 = vadd.f32 0.0, %v1218
    %v1220 = vpop.f32.mrb[0].mxu0
    %v1221 = vadd.f32 0.0, %v1220
    %1222 = vmatprep.mubr.bf16.mxu0 %v431
    %1223 = vmatmul.mubr.bf16.gmra.mrb[0].mxu0 %v430
    %v1224 = vpop.f32.mrb[0].mxu0
    %v1225 = vadd.f32 0.0, %v1224
    %v1226 = vpop.f32.mrb[0].mxu0
    %v1227 = vadd.f32 0.0, %v1226
    %v1228 = vpop.f32.mrb[0].mxu0
    %v1229 = vadd.f32 0.0, %v1228
    %v1230 = vpop.f32.mrb[0].mxu0
    %v1231 = vadd.f32 0.0, %v1230
    %1232 = vmatprep.mubr.bf16.mxu0 %v433
    %1233 = vmatmul.mubr.bf16.gmra.mrb[0].mxu0 %v432
    %v1234 = vpop.f32.mrb[0].mxu0
    %v1235 = vadd.f32 0.0, %v1234
    %v1236 = vpop.f32.mrb[0].mxu0
    %v1237 = vadd.f32 0.0, %v1236
    %v1238 = vpop.f32.mrb[0].mxu0
    %v1239 = vadd.f32 0.0, %v1238
    %v1240 = vpop.f32.mrb[0].mxu0
    %v1241 = vadd.f32 0.0, %v1240
    %1242 = vmatprep.mubr.bf16.mxu0 %v435
    %1243 = vmatmul.mubr.bf16.gmra.mrb[0].mxu0 %v434
    %v1244 = vpop.f32.mrb[0].mxu0
    %v1245 = vadd.f32 0.0, %v1244
    %v1246 = vpop.f32.mrb[0].mxu0
    %v1247 = vadd.f32 0.0, %v1246
    %v1248 = vpop.f32.mrb[0].mxu0
    %v1249 = vadd.f32 0.0, %v1248
    %v1250 = vpop.f32.mrb[0].mxu0
    %v1251 = vadd.f32 0.0, %v1250
    %1252 = vmatprep.mubr.bf16.mxu0 %v437
    %1253 = vmatmul.mubr.bf16.gmra.mrb[0].mxu0 %v436
    %v1254 = vpop.f32.mrb[0].mxu0
    %v1255 = vadd.f32 0.0, %v1254
    %v1256 = vpop.f32.mrb[0].mxu0
    %v1257 = vadd.f32 0.0, %v1256
    %v1258 = vpop.f32.mrb[0].mxu0
    %v1259 = vadd.f32 0.0, %v1258
    %v1260 = vpop.f32.mrb[0].mxu0
    %v1261 = vadd.f32 0.0, %v1260
    %1262 = vmatprep.mubr.bf16.mxu0 %v439
    %1263 = vmatmul.mubr.bf16.gmra.mrb[0].mxu0 %v438
    %v1264 = vpop.f32.mrb[0].mxu0
    %v1265 = vadd.f32 0.0, %v1264
    %v1266 = vpop.f32.mrb[0].mxu0
    %v1267 = vadd.f32 0.0, %v1266
    %v1268 = vpop.f32.mrb[0].mxu0
    %v1269 = vadd.f32 0.0, %v1268
    %v1270 = vpop.f32.mrb[0].mxu0
    %v1271 = vadd.f32 0.0, %v1270
    %1272 = vmatprep.mubr.bf16.mxu0 %v441
    %1273 = vmatmul.mubr.bf16.gmra.mrb[0].mxu0 %v440
    %v1274 = vpop.f32.mrb[0].mxu0
    %v1275 = vadd.f32 0.0, %v1274
    %v1276 = vpop.f32.mrb[0].mxu0
    %v1277 = vadd.f32 0.0, %v1276
    %v1278 = vpop.f32.mrb[0].mxu0
    %v1279 = vadd.f32 0.0, %v1278
    %v1280 = vpop.f32.mrb[0].mxu0
    %v1281 = vadd.f32 0.0, %v1280
    %1282 = vmatprep.mubr.bf16.mxu0 %v443
    %1283 = vmatmul.mubr.bf16.gmra.mrb[0].mxu0 %v442
    %v1284 = vpop.f32.mrb[0].mxu0
    %v1285 = vadd.f32 0.0, %v1284
    %v1286 = vpop.f32.mrb[0].mxu0
    %v1287 = vadd.f32 0.0, %v1286
    %v1288 = vpop.f32.mrb[0].mxu0
    %v1289 = vadd.f32 0.0, %v1288
    %v1290 = vpop.f32.mrb[0].mxu0
    %v1291 = vadd.f32 0.0, %v1290
    %1292 = vmatprep.mubr.bf16.mxu0 %v445
    %1293 = vmatmul.mubr.bf16.gmra.mrb[0].mxu0 %v444
    %v1294 = vpop.f32.mrb[0].mxu0
    %v1295 = vadd.f32 0.0, %v1294
    %v1296 = vpop.f32.mrb[0].mxu0
    %v1297 = vadd.f32 0.0, %v1296
    %v1298 = vpop.f32.mrb[0].mxu0
    %v1299 = vadd.f32 0.0, %v1298
    %v1300 = vpop.f32.mrb[0].mxu0
    %v1301 = vadd.f32 0.0, %v1300
    %1302 = vmatprep.mubr.bf16.mxu0 %v447
    %1303 = vmatmul.mubr.bf16.gmra.mrb[0].mxu0 %v446
    %v1304 = vpop.f32.mrb[0].mxu0
    %v1305 = vadd.f32 0.0, %v1304
    %v1306 = vpop.f32.mrb[0].mxu0
    %v1307 = vadd.f32 0.0, %v1306
    %v1308 = vpop.f32.mrb[0].mxu0
    %v1309 = vadd.f32 0.0, %v1308
    %v1310 = vpop.f32.mrb[0].mxu0
    %v1311 = vadd.f32 0.0, %v1310
    %1312 = vmatprep.mubr.bf16.mxu0 %v449
    %1313 = vmatmul.mubr.bf16.gmra.mrb[0].mxu0 %v448
    %v1314 = vpop.f32.mrb[0].mxu0
    %v1315 = vadd.f32 0.0, %v1314
    %v1316 = vpop.f32.mrb[0].mxu0
    %v1317 = vadd.f32 0.0, %v1316
    %v1318 = vpop.f32.mrb[0].mxu0
    %v1319 = vadd.f32 0.0, %v1318
    %v1320 = vpop.f32.mrb[0].mxu0
    %v1321 = vadd.f32 0.0, %v1320
    %1322 = vmatprep.mubr.bf16.mxu0 %v451
    %1323 = vmatmul.mubr.bf16.gmra.mrb[0].mxu0 %v450
    %v1324 = vpop.f32.mrb[0].mxu0
    %v1325 = vadd.f32 0.0, %v1324
    %v1326 = vpop.f32.mrb[0].mxu0
    %v1327 = vadd.f32 0.0, %v1326
    %v1328 = vpop.f32.mrb[0].mxu0
    %v1329 = vadd.f32 0.0, %v1328
    %v1330 = vpop.f32.mrb[0].mxu0
    %v1331 = vadd.f32 0.0, %v1330
    %1332 = vmatprep.mubr.bf16.mxu0 %v453
    %1333 = vmatmul.mubr.bf16.gmra.mrb[0].mxu0 %v452
    %v1334 = vpop.f32.mrb[0].mxu0
    %v1335 = vadd.f32 0.0, %v1334
    %v1336 = vpop.f32.mrb[0].mxu0
    %v1337 = vadd.f32 0.0, %v1336
    %v1338 = vpop.f32.mrb[0].mxu0
    %v1339 = vadd.f32 0.0, %v1338
    %v1340 = vpop.f32.mrb[0].mxu0
    %v1341 = vadd.f32 0.0, %v1340
    %1342 = vmatprep.mubr.bf16.mxu0 %v455
    %1343 = vmatmul.mubr.bf16.gmra.mrb[0].mxu0 %v454
    %v1344 = vpop.f32.mrb[0].mxu0
    %v1345 = vadd.f32 0.0, %v1344
    %v1346 = vpop.f32.mrb[0].mxu0
    %v1347 = vadd.f32 0.0, %v1346
    %v1348 = vpop.f32.mrb[0].mxu0
    %v1349 = vadd.f32 0.0, %v1348
    %v1350 = vpop.f32.mrb[0].mxu0
    %v1351 = vadd.f32 0.0, %v1350
    %1352 = vdwg.mxu0
    %1353 = vmatprep.subr.bf16.mxu0 %v811
    %1354 = vmatpush1.bf16.msra.mxu0 %v810
    %1355 = vmatprep.subr.bf16.mxu0 %v817
    %1356 = vmatpush1.bf16.msra.mxu0 %v816
    %1357 = vmatprep.subr.bf16.mxu0 %v823
    %1358 = vmatpush1.bf16.msra.mxu0 %v822
    %1359 = vmatprep.subr.bf16.mxu0 %v829
    %1360 = vmatpush1.bf16.msra.mxu0 %v828
    %1361 = vmatprep.subr.bf16.mxu0 %v835
    %1362 = vmatpush1.bf16.msra.mxu0 %v834
    %1363 = vmatprep.subr.bf16.mxu0 %v841
    %1364 = vmatpush1.bf16.msra.mxu0 %v840
    %1365 = vmatprep.subr.bf16.mxu0 %v847
    %1366 = vmatpush1.bf16.msra.mxu0 %v846
    %1367 = vmatprep.subr.bf16.mxu0 %v853
    %1368 = vmatpush1.bf16.msra.mxu0 %v852
    %1369 = vmatprep.subr.bf16.mxu0 %v859
    %1370 = vmatpush1.bf16.msra.mxu0 %v858
    %1371 = vmatprep.subr.bf16.mxu0 %v865
    %1372 = vmatpush1.bf16.msra.mxu0 %v864
    %1373 = vmatprep.subr.bf16.mxu0 %v871
    %1374 = vmatpush1.bf16.msra.mxu0 %v870
    %1375 = vmatprep.subr.bf16.mxu0 %v877
    %1376 = vmatpush1.bf16.msra.mxu0 %v876
    %1377 = vmatprep.subr.bf16.mxu0 %v883
    %1378 = vmatpush1.bf16.msra.mxu0 %v882
    %1379 = vmatprep.subr.bf16.mxu0 %v889
    %1380 = vmatpush1.bf16.msra.mxu0 %v888
    %1381 = vmatprep.subr.bf16.mxu0 %v895
    %1382 = vmatpush1.bf16.msra.mxu0 %v894
    %1383 = vmatprep.subr.bf16.mxu0 %v901
    %1384 = vmatpush1.bf16.msra.mxu0 %v900
    %1385 = vmatprep.mubr.bf16.mxu0 %v393
    %1386 = vmatmul.mubr.bf16.gmra.mrb[0].mxu0 %v392
    %v1387 = vpop.f32.mrb[0].mxu0
    %v1388 = vadd.f32 0.0, %v1387
    %v1389 = vpop.f32.mrb[0].mxu0
    %v1390 = vadd.f32 0.0, %v1389
    %v1391 = vpop.f32.mrb[0].mxu0
    %v1392 = vadd.f32 0.0, %v1391
    %v1393 = vpop.f32.mrb[0].mxu0
    %v1394 = vadd.f32 0.0, %v1393
    %1395 = vmatprep.mubr.bf16.mxu0 %v395
    %1396 = vmatmul.mubr.bf16.gmra.mrb[0].mxu0 %v394
    %v1397 = vpop.f32.mrb[0].mxu0
    %v1398 = vadd.f32 0.0, %v1397
    %v1399 = vpop.f32.mrb[0].mxu0
    %v1400 = vadd.f32 0.0, %v1399
    %v1401 = vpop.f32.mrb[0].mxu0
    %v1402 = vadd.f32 0.0, %v1401
    %v1403 = vpop.f32.mrb[0].mxu0
    %v1404 = vadd.f32 0.0, %v1403
    %1405 = vmatprep.mubr.bf16.mxu0 %v397
    %1406 = vmatmul.mubr.bf16.gmra.mrb[0].mxu0 %v396
    %v1407 = vpop.f32.mrb[0].mxu0
    %v1408 = vadd.f32 0.0, %v1407
    %v1409 = vpop.f32.mrb[0].mxu0
    %v1410 = vadd.f32 0.0, %v1409
    %v1411 = vpop.f32.mrb[0].mxu0
    %v1412 = vadd.f32 0.0, %v1411
    %v1413 = vpop.f32.mrb[0].mxu0
    %v1414 = vadd.f32 0.0, %v1413
    %1415 = vmatprep.mubr.bf16.mxu0 %v399
    %1416 = vmatmul.mubr.bf16.gmra.mrb[0].mxu0 %v398
    %v1417 = vpop.f32.mrb[0].mxu0
    %v1418 = vadd.f32 0.0, %v1417
    %v1419 = vpop.f32.mrb[0].mxu0
    %v1420 = vadd.f32 0.0, %v1419
    %v1421 = vpop.f32.mrb[0].mxu0
    %v1422 = vadd.f32 0.0, %v1421
    %v1423 = vpop.f32.mrb[0].mxu0
    %v1424 = vadd.f32 0.0, %v1423
    %1425 = vmatprep.mubr.bf16.mxu0 %v401
    %1426 = vmatmul.mubr.bf16.gmra.mrb[0].mxu0 %v400
    %v1427 = vpop.f32.mrb[0].mxu0
    %v1428 = vadd.f32 0.0, %v1427
    %v1429 = vpop.f32.mrb[0].mxu0
    %v1430 = vadd.f32 0.0, %v1429
    %v1431 = vpop.f32.mrb[0].mxu0
    %v1432 = vadd.f32 0.0, %v1431
    %v1433 = vpop.f32.mrb[0].mxu0
    %v1434 = vadd.f32 0.0, %v1433
    %1435 = vmatprep.mubr.bf16.mxu0 %v403
    %1436 = vmatmul.mubr.bf16.gmra.mrb[0].mxu0 %v402
    %v1437 = vpop.f32.mrb[0].mxu0
    %v1438 = vadd.f32 0.0, %v1437
    %v1439 = vpop.f32.mrb[0].mxu0
    %v1440 = vadd.f32 0.0, %v1439
    %v1441 = vpop.f32.mrb[0].mxu0
    %v1442 = vadd.f32 0.0, %v1441
    %v1443 = vpop.f32.mrb[0].mxu0
    %v1444 = vadd.f32 0.0, %v1443
    %1445 = vmatprep.mubr.bf16.mxu0 %v405
    %1446 = vmatmul.mubr.bf16.gmra.mrb[0].mxu0 %v404
    %v1447 = vpop.f32.mrb[0].mxu0
    %v1448 = vadd.f32 0.0, %v1447
    %v1449 = vpop.f32.mrb[0].mxu0
    %v1450 = vadd.f32 0.0, %v1449
    %v1451 = vpop.f32.mrb[0].mxu0
    %v1452 = vadd.f32 0.0, %v1451
    %v1453 = vpop.f32.mrb[0].mxu0
    %v1454 = vadd.f32 0.0, %v1453
    %1455 = vmatprep.mubr.bf16.mxu0 %v407
    %1456 = vmatmul.mubr.bf16.gmra.mrb[0].mxu0 %v406
    %v1457 = vpop.f32.mrb[0].mxu0
    %v1458 = vadd.f32 0.0, %v1457
    %v1459 = vpop.f32.mrb[0].mxu0
    %v1460 = vadd.f32 0.0, %v1459
    %v1461 = vpop.f32.mrb[0].mxu0
    %v1462 = vadd.f32 0.0, %v1461
    %v1463 = vpop.f32.mrb[0].mxu0
    %v1464 = vadd.f32 0.0, %v1463
    %1465 = vmatprep.mubr.bf16.mxu0 %v409
    %1466 = vmatmul.mubr.bf16.gmra.mrb[0].mxu0 %v408
    %v1467 = vpop.f32.mrb[0].mxu0
    %v1468 = vadd.f32 0.0, %v1467
    %v1469 = vpop.f32.mrb[0].mxu0
    %v1470 = vadd.f32 0.0, %v1469
    %v1471 = vpop.f32.mrb[0].mxu0
    %v1472 = vadd.f32 0.0, %v1471
    %v1473 = vpop.f32.mrb[0].mxu0
    %v1474 = vadd.f32 0.0, %v1473
    %1475 = vmatprep.mubr.bf16.mxu0 %v411
    %1476 = vmatmul.mubr.bf16.gmra.mrb[0].mxu0 %v410
    %v1477 = vpop.f32.mrb[0].mxu0
    %v1478 = vadd.f32 0.0, %v1477
    %v1479 = vpop.f32.mrb[0].mxu0
    %v1480 = vadd.f32 0.0, %v1479
    %v1481 = vpop.f32.mrb[0].mxu0
    %v1482 = vadd.f32 0.0, %v1481
    %v1483 = vpop.f32.mrb[0].mxu0
    %v1484 = vadd.f32 0.0, %v1483
    %1485 = vmatprep.mubr.bf16.mxu0 %v413
    %1486 = vmatmul.mubr.bf16.gmra.mrb[0].mxu0 %v412
    %v1487 = vpop.f32.mrb[0].mxu0
    %v1488 = vadd.f32 0.0, %v1487
    %v1489 = vpop.f32.mrb[0].mxu0
    %v1490 = vadd.f32 0.0, %v1489
    %v1491 = vpop.f32.mrb[0].mxu0
    %v1492 = vadd.f32 0.0, %v1491
    %v1493 = vpop.f32.mrb[0].mxu0
    %v1494 = vadd.f32 0.0, %v1493
    %1495 = vmatprep.mubr.bf16.mxu0 %v415
    %1496 = vmatmul.mubr.bf16.gmra.mrb[0].mxu0 %v414
    %v1497 = vpop.f32.mrb[0].mxu0
    %v1498 = vadd.f32 0.0, %v1497
    %v1499 = vpop.f32.mrb[0].mxu0
    %v1500 = vadd.f32 0.0, %v1499
    %v1501 = vpop.f32.mrb[0].mxu0
    %v1502 = vadd.f32 0.0, %v1501
    %v1503 = vpop.f32.mrb[0].mxu0
    %v1504 = vadd.f32 0.0, %v1503
    %1505 = vmatprep.mubr.bf16.mxu0 %v417
    %1506 = vmatmul.mubr.bf16.gmra.mrb[0].mxu0 %v416
    %v1507 = vpop.f32.mrb[0].mxu0
    %v1508 = vadd.f32 0.0, %v1507
    %v1509 = vpop.f32.mrb[0].mxu0
    %v1510 = vadd.f32 0.0, %v1509
    %v1511 = vpop.f32.mrb[0].mxu0
    %v1512 = vadd.f32 0.0, %v1511
    %v1513 = vpop.f32.mrb[0].mxu0
    %v1514 = vadd.f32 0.0, %v1513
    %1515 = vmatprep.mubr.bf16.mxu0 %v419
    %1516 = vmatmul.mubr.bf16.gmra.mrb[0].mxu0 %v418
    %v1517 = vpop.f32.mrb[0].mxu0
    %v1518 = vadd.f32 0.0, %v1517
    %v1519 = vpop.f32.mrb[0].mxu0
    %v1520 = vadd.f32 0.0, %v1519
    %v1521 = vpop.f32.mrb[0].mxu0
    %v1522 = vadd.f32 0.0, %v1521
    %v1523 = vpop.f32.mrb[0].mxu0
    %v1524 = vadd.f32 0.0, %v1523
    %1525 = vmatprep.mubr.bf16.mxu0 %v421
    %1526 = vmatmul.mubr.bf16.gmra.mrb[0].mxu0 %v420
    %v1527 = vpop.f32.mrb[0].mxu0
    %v1528 = vadd.f32 0.0, %v1527
    %v1529 = vpop.f32.mrb[0].mxu0
    %v1530 = vadd.f32 0.0, %v1529
    %v1531 = vpop.f32.mrb[0].mxu0
    %v1532 = vadd.f32 0.0, %v1531
    %v1533 = vpop.f32.mrb[0].mxu0
    %v1534 = vadd.f32 0.0, %v1533
    %1535 = vmatprep.mubr.bf16.mxu0 %v423
    %1536 = vmatmul.mubr.bf16.gmra.mrb[0].mxu0 %v422
    %v1537 = vpop.f32.mrb[0].mxu0
    %v1538 = vadd.f32 0.0, %v1537
    %v1539 = vpop.f32.mrb[0].mxu0
    %v1540 = vadd.f32 0.0, %v1539
    %v1541 = vpop.f32.mrb[0].mxu0
    %v1542 = vadd.f32 0.0, %v1541
    %v1543 = vpop.f32.mrb[0].mxu0
    %v1544 = vadd.f32 0.0, %v1543
    %1545 = vmatprep.mubr.bf16.mxu0 %v425
    %1546 = vmatmul.mubr.bf16.gmra.mrb[0].mxu0 %v424
    %v1547 = vpop.f32.mrb[0].mxu0
    %v1548 = vadd.f32 0.0, %v1547
    %v1549 = vpop.f32.mrb[0].mxu0
    %v1550 = vadd.f32 0.0, %v1549
    %v1551 = vpop.f32.mrb[0].mxu0
    %v1552 = vadd.f32 0.0, %v1551
    %v1553 = vpop.f32.mrb[0].mxu0
    %v1554 = vadd.f32 0.0, %v1553
    %1555 = vmatprep.mubr.bf16.mxu0 %v427
    %1556 = vmatmul.mubr.bf16.gmra.mrb[0].mxu0 %v426
    %v1557 = vpop.f32.mrb[0].mxu0
    %v1558 = vadd.f32 0.0, %v1557
    %v1559 = vpop.f32.mrb[0].mxu0
    %v1560 = vadd.f32 0.0, %v1559
    %v1561 = vpop.f32.mrb[0].mxu0
    %v1562 = vadd.f32 0.0, %v1561
    %v1563 = vpop.f32.mrb[0].mxu0
    %v1564 = vadd.f32 0.0, %v1563
    %1565 = vmatprep.mubr.bf16.mxu0 %v429
    %1566 = vmatmul.mubr.bf16.gmra.mrb[0].mxu0 %v428
    %v1567 = vpop.f32.mrb[0].mxu0
    %v1568 = vadd.f32 0.0, %v1567
    %v1569 = vpop.f32.mrb[0].mxu0
    %v1570 = vadd.f32 0.0, %v1569
    %v1571 = vpop.f32.mrb[0].mxu0
    %v1572 = vadd.f32 0.0, %v1571
    %v1573 = vpop.f32.mrb[0].mxu0
    %v1574 = vadd.f32 0.0, %v1573
    %1575 = vmatprep.mubr.bf16.mxu0 %v431
    %1576 = vmatmul.mubr.bf16.gmra.mrb[0].mxu0 %v430
    %v1577 = vpop.f32.mrb[0].mxu0
    %v1578 = vadd.f32 0.0, %v1577
    %v1579 = vpop.f32.mrb[0].mxu0
    %v1580 = vadd.f32 0.0, %v1579
    %v1581 = vpop.f32.mrb[0].mxu0
    %v1582 = vadd.f32 0.0, %v1581
    %v1583 = vpop.f32.mrb[0].mxu0
    %v1584 = vadd.f32 0.0, %v1583
    %1585 = vmatprep.mubr.bf16.mxu0 %v433
    %1586 = vmatmul.mubr.bf16.gmra.mrb[0].mxu0 %v432
    %v1587 = vpop.f32.mrb[0].mxu0
    %v1588 = vadd.f32 0.0, %v1587
    %v1589 = vpop.f32.mrb[0].mxu0
    %v1590 = vadd.f32 0.0, %v1589
    %v1591 = vpop.f32.mrb[0].mxu0
    %v1592 = vadd.f32 0.0, %v1591
    %v1593 = vpop.f32.mrb[0].mxu0
    %v1594 = vadd.f32 0.0, %v1593
    %1595 = vmatprep.mubr.bf16.mxu0 %v435
    %1596 = vmatmul.mubr.bf16.gmra.mrb[0].mxu0 %v434
    %v1597 = vpop.f32.mrb[0].mxu0
    %v1598 = vadd.f32 0.0, %v1597
    %v1599 = vpop.f32.mrb[0].mxu0
    %v1600 = vadd.f32 0.0, %v1599
    %v1601 = vpop.f32.mrb[0].mxu0
    %v1602 = vadd.f32 0.0, %v1601
    %v1603 = vpop.f32.mrb[0].mxu0
    %v1604 = vadd.f32 0.0, %v1603
    %1605 = vmatprep.mubr.bf16.mxu0 %v437
    %1606 = vmatmul.mubr.bf16.gmra.mrb[0].mxu0 %v436
    %v1607 = vpop.f32.mrb[0].mxu0
    %v1608 = vadd.f32 0.0, %v1607
    %v1609 = vpop.f32.mrb[0].mxu0
    %v1610 = vadd.f32 0.0, %v1609
    %v1611 = vpop.f32.mrb[0].mxu0
    %v1612 = vadd.f32 0.0, %v1611
    %v1613 = vpop.f32.mrb[0].mxu0
    %v1614 = vadd.f32 0.0, %v1613
    %1615 = vmatprep.mubr.bf16.mxu0 %v439
    %1616 = vmatmul.mubr.bf16.gmra.mrb[0].mxu0 %v438
    %v1617 = vpop.f32.mrb[0].mxu0
    %v1618 = vadd.f32 0.0, %v1617
    %v1619 = vpop.f32.mrb[0].mxu0
    %v1620 = vadd.f32 0.0, %v1619
    %v1621 = vpop.f32.mrb[0].mxu0
    %v1622 = vadd.f32 0.0, %v1621
    %v1623 = vpop.f32.mrb[0].mxu0
    %v1624 = vadd.f32 0.0, %v1623
    %1625 = vmatprep.mubr.bf16.mxu0 %v441
    %1626 = vmatmul.mubr.bf16.gmra.mrb[0].mxu0 %v440
    %v1627 = vpop.f32.mrb[0].mxu0
    %v1628 = vadd.f32 0.0, %v1627
    %v1629 = vpop.f32.mrb[0].mxu0
    %v1630 = vadd.f32 0.0, %v1629
    %v1631 = vpop.f32.mrb[0].mxu0
    %v1632 = vadd.f32 0.0, %v1631
    %v1633 = vpop.f32.mrb[0].mxu0
    %v1634 = vadd.f32 0.0, %v1633
    %1635 = vmatprep.mubr.bf16.mxu0 %v443
    %1636 = vmatmul.mubr.bf16.gmra.mrb[0].mxu0 %v442
    %v1637 = vpop.f32.mrb[0].mxu0
    %v1638 = vadd.f32 0.0, %v1637
    %v1639 = vpop.f32.mrb[0].mxu0
    %v1640 = vadd.f32 0.0, %v1639
    %v1641 = vpop.f32.mrb[0].mxu0
    %v1642 = vadd.f32 0.0, %v1641
    %v1643 = vpop.f32.mrb[0].mxu0
    %v1644 = vadd.f32 0.0, %v1643
    %1645 = vmatprep.mubr.bf16.mxu0 %v445
    %1646 = vmatmul.mubr.bf16.gmra.mrb[0].mxu0 %v444
    %v1647 = vpop.f32.mrb[0].mxu0
    %v1648 = vadd.f32 0.0, %v1647
    %v1649 = vpop.f32.mrb[0].mxu0
    %v1650 = vadd.f32 0.0, %v1649
    %v1651 = vpop.f32.mrb[0].mxu0
    %v1652 = vadd.f32 0.0, %v1651
    %v1653 = vpop.f32.mrb[0].mxu0
    %v1654 = vadd.f32 0.0, %v1653
    %1655 = vmatprep.mubr.bf16.mxu0 %v447
    %1656 = vmatmul.mubr.bf16.gmra.mrb[0].mxu0 %v446
    %v1657 = vpop.f32.mrb[0].mxu0
    %v1658 = vadd.f32 0.0, %v1657
    %v1659 = vpop.f32.mrb[0].mxu0
    %v1660 = vadd.f32 0.0, %v1659
    %v1661 = vpop.f32.mrb[0].mxu0
    %v1662 = vadd.f32 0.0, %v1661
    %v1663 = vpop.f32.mrb[0].mxu0
    %v1664 = vadd.f32 0.0, %v1663
    %1665 = vmatprep.mubr.bf16.mxu0 %v449
    %1666 = vmatmul.mubr.bf16.gmra.mrb[0].mxu0 %v448
    %v1667 = vpop.f32.mrb[0].mxu0
    %v1668 = vadd.f32 0.0, %v1667
    %v1669 = vpop.f32.mrb[0].mxu0
    %v1670 = vadd.f32 0.0, %v1669
    %v1671 = vpop.f32.mrb[0].mxu0
    %v1672 = vadd.f32 0.0, %v1671
    %v1673 = vpop.f32.mrb[0].mxu0
    %v1674 = vadd.f32 0.0, %v1673
    %1675 = vmatprep.mubr.bf16.mxu0 %v451
    %1676 = vmatmul.mubr.bf16.gmra.mrb[0].mxu0 %v450
    %v1677 = vpop.f32.mrb[0].mxu0
    %v1678 = vadd.f32 0.0, %v1677
    %v1679 = vpop.f32.mrb[0].mxu0
    %v1680 = vadd.f32 0.0, %v1679
    %v1681 = vpop.f32.mrb[0].mxu0
    %v1682 = vadd.f32 0.0, %v1681
    %v1683 = vpop.f32.mrb[0].mxu0
    %v1684 = vadd.f32 0.0, %v1683
    %1685 = vmatprep.mubr.bf16.mxu0 %v453
    %1686 = vmatmul.mubr.bf16.gmra.mrb[0].mxu0 %v452
    %v1687 = vpop.f32.mrb[0].mxu0
    %v1688 = vadd.f32 0.0, %v1687
    %v1689 = vpop.f32.mrb[0].mxu0
    %v1690 = vadd.f32 0.0, %v1689
    %v1691 = vpop.f32.mrb[0].mxu0
    %v1692 = vadd.f32 0.0, %v1691
    %v1693 = vpop.f32.mrb[0].mxu0
    %v1694 = vadd.f32 0.0, %v1693
    %1695 = vmatprep.mubr.bf16.mxu0 %v455
    %1696 = vmatmul.mubr.bf16.gmra.mrb[0].mxu0 %v454
    %v1697 = vpop.f32.mrb[0].mxu0
    %v1698 = vadd.f32 0.0, %v1697
    %v1699 = vpop.f32.mrb[0].mxu0
    %v1700 = vadd.f32 0.0, %v1699
    %v1701 = vpop.f32.mrb[0].mxu0
    %v1702 = vadd.f32 0.0, %v1701
    %v1703 = vpop.f32.mrb[0].mxu0
    %v1704 = vadd.f32 0.0, %v1703
    %1705 = vdwg.mxu0
    %1706 = vmatprep.subr.bf16.mxu0 %v813
    %1707 = vmatpush1.bf16.msra.mxu0 %v812
    %1708 = vmatprep.subr.bf16.mxu0 %v819
    %1709 = vmatpush1.bf16.msra.mxu0 %v818
    %1710 = vmatprep.subr.bf16.mxu0 %v825
    %1711 = vmatpush1.bf16.msra.mxu0 %v824
    %1712 = vmatprep.subr.bf16.mxu0 %v831
    %1713 = vmatpush1.bf16.msra.mxu0 %v830
    %1714 = vmatprep.subr.bf16.mxu0 %v837
    %1715 = vmatpush1.bf16.msra.mxu0 %v836
    %1716 = vmatprep.subr.bf16.mxu0 %v843
    %1717 = vmatpush1.bf16.msra.mxu0 %v842
    %1718 = vmatprep.subr.bf16.mxu0 %v849
    %1719 = vmatpush1.bf16.msra.mxu0 %v848
    %1720 = vmatprep.subr.bf16.mxu0 %v855
    %1721 = vmatpush1.bf16.msra.mxu0 %v854
    %1722 = vmatprep.subr.bf16.mxu0 %v861
    %1723 = vmatpush1.bf16.msra.mxu0 %v860
    %1724 = vmatprep.subr.bf16.mxu0 %v867
    %1725 = vmatpush1.bf16.msra.mxu0 %v866
    %1726 = vmatprep.subr.bf16.mxu0 %v873
    %1727 = vmatpush1.bf16.msra.mxu0 %v872
    %1728 = vmatprep.subr.bf16.mxu0 %v879
    %1729 = vmatpush1.bf16.msra.mxu0 %v878
    %1730 = vmatprep.subr.bf16.mxu0 %v885
    %1731 = vmatpush1.bf16.msra.mxu0 %v884
    %1732 = vmatprep.subr.bf16.mxu0 %v891
    %1733 = vmatpush1.bf16.msra.mxu0 %v890
    %1734 = vmatprep.subr.bf16.mxu0 %v897
    %1735 = vmatpush1.bf16.msra.mxu0 %v896
    %1736 = vmatprep.subr.bf16.mxu0 %v903
    %1737 = vmatpush1.bf16.msra.mxu0 %v902
    %1738 = vmatprep.mubr.bf16.mxu0 %v393
    %1739 = vmatmul.mubr.bf16.gmra.mrb[0].mxu0 %v392
    %v1740 = vpop.f32.mrb[0].mxu0
    %v1741 = vadd.f32 0.0, %v1740
    %v1742 = vpop.f32.mrb[0].mxu0
    %v1743 = vadd.f32 0.0, %v1742
    %v1744 = vpop.f32.mrb[0].mxu0
    %v1745 = vadd.f32 0.0, %v1744
    %v1746 = vpop.f32.mrb[0].mxu0
    %v1747 = vadd.f32 0.0, %v1746
    %1748 = vmatprep.mubr.bf16.mxu0 %v395
    %1749 = vmatmul.mubr.bf16.gmra.mrb[0].mxu0 %v394
    %v1750 = vpop.f32.mrb[0].mxu0
    %v1751 = vadd.f32 0.0, %v1750
    %v1752 = vpop.f32.mrb[0].mxu0
    %v1753 = vadd.f32 0.0, %v1752
    %v1754 = vpop.f32.mrb[0].mxu0
    %v1755 = vadd.f32 0.0, %v1754
    %v1756 = vpop.f32.mrb[0].mxu0
    %v1757 = vadd.f32 0.0, %v1756
    %1758 = vmatprep.mubr.bf16.mxu0 %v397
    %1759 = vmatmul.mubr.bf16.gmra.mrb[0].mxu0 %v396
    %v1760 = vpop.f32.mrb[0].mxu0
    %v1761 = vadd.f32 0.0, %v1760
    %v1762 = vpop.f32.mrb[0].mxu0
    %v1763 = vadd.f32 0.0, %v1762
    %v1764 = vpop.f32.mrb[0].mxu0
    %v1765 = vadd.f32 0.0, %v1764
    %v1766 = vpop.f32.mrb[0].mxu0
    %v1767 = vadd.f32 0.0, %v1766
    %1768 = vmatprep.mubr.bf16.mxu0 %v399
    %1769 = vmatmul.mubr.bf16.gmra.mrb[0].mxu0 %v398
    %v1770 = vpop.f32.mrb[0].mxu0
    %v1771 = vadd.f32 0.0, %v1770
    %v1772 = vpop.f32.mrb[0].mxu0
    %v1773 = vadd.f32 0.0, %v1772
    %v1774 = vpop.f32.mrb[0].mxu0
    %v1775 = vadd.f32 0.0, %v1774
    %v1776 = vpop.f32.mrb[0].mxu0
    %v1777 = vadd.f32 0.0, %v1776
    %1778 = vmatprep.mubr.bf16.mxu0 %v401
    %1779 = vmatmul.mubr.bf16.gmra.mrb[0].mxu0 %v400
    %v1780 = vpop.f32.mrb[0].mxu0
    %v1781 = vadd.f32 0.0, %v1780
    %v1782 = vpop.f32.mrb[0].mxu0
    %v1783 = vadd.f32 0.0, %v1782
    %v1784 = vpop.f32.mrb[0].mxu0
    %v1785 = vadd.f32 0.0, %v1784
    %v1786 = vpop.f32.mrb[0].mxu0
    %v1787 = vadd.f32 0.0, %v1786
    %1788 = vmatprep.mubr.bf16.mxu0 %v403
    %1789 = vmatmul.mubr.bf16.gmra.mrb[0].mxu0 %v402
    %v1790 = vpop.f32.mrb[0].mxu0
    %v1791 = vadd.f32 0.0, %v1790
    %v1792 = vpop.f32.mrb[0].mxu0
    %v1793 = vadd.f32 0.0, %v1792
    %v1794 = vpop.f32.mrb[0].mxu0
    %v1795 = vadd.f32 0.0, %v1794
    %v1796 = vpop.f32.mrb[0].mxu0
    %v1797 = vadd.f32 0.0, %v1796
    %1798 = vmatprep.mubr.bf16.mxu0 %v405
    %1799 = vmatmul.mubr.bf16.gmra.mrb[0].mxu0 %v404
    %v1800 = vpop.f32.mrb[0].mxu0
    %v1801 = vadd.f32 0.0, %v1800
    %v1802 = vpop.f32.mrb[0].mxu0
    %v1803 = vadd.f32 0.0, %v1802
    %v1804 = vpop.f32.mrb[0].mxu0
    %v1805 = vadd.f32 0.0, %v1804
    %v1806 = vpop.f32.mrb[0].mxu0
    %v1807 = vadd.f32 0.0, %v1806
    %1808 = vmatprep.mubr.bf16.mxu0 %v407
    %1809 = vmatmul.mubr.bf16.gmra.mrb[0].mxu0 %v406
    %v1810 = vpop.f32.mrb[0].mxu0
    %v1811 = vadd.f32 0.0, %v1810
    %v1812 = vpop.f32.mrb[0].mxu0
    %v1813 = vadd.f32 0.0, %v1812
    %v1814 = vpop.f32.mrb[0].mxu0
    %v1815 = vadd.f32 0.0, %v1814
    %v1816 = vpop.f32.mrb[0].mxu0
    %v1817 = vadd.f32 0.0, %v1816
    %1818 = vmatprep.mubr.bf16.mxu0 %v409
    %1819 = vmatmul.mubr.bf16.gmra.mrb[0].mxu0 %v408
    %v1820 = vpop.f32.mrb[0].mxu0
    %v1821 = vadd.f32 0.0, %v1820
    %v1822 = vpop.f32.mrb[0].mxu0
    %v1823 = vadd.f32 0.0, %v1822
    %v1824 = vpop.f32.mrb[0].mxu0
    %v1825 = vadd.f32 0.0, %v1824
    %v1826 = vpop.f32.mrb[0].mxu0
    %v1827 = vadd.f32 0.0, %v1826
    %1828 = vmatprep.mubr.bf16.mxu0 %v411
    %1829 = vmatmul.mubr.bf16.gmra.mrb[0].mxu0 %v410
    %v1830 = vpop.f32.mrb[0].mxu0
    %v1831 = vadd.f32 0.0, %v1830
    %v1832 = vpop.f32.mrb[0].mxu0
    %v1833 = vadd.f32 0.0, %v1832
    %v1834 = vpop.f32.mrb[0].mxu0
    %v1835 = vadd.f32 0.0, %v1834
    %v1836 = vpop.f32.mrb[0].mxu0
    %v1837 = vadd.f32 0.0, %v1836
    %1838 = vmatprep.mubr.bf16.mxu0 %v413
    %1839 = vmatmul.mubr.bf16.gmra.mrb[0].mxu0 %v412
    %v1840 = vpop.f32.mrb[0].mxu0
    %v1841 = vadd.f32 0.0, %v1840
    %v1842 = vpop.f32.mrb[0].mxu0
    %v1843 = vadd.f32 0.0, %v1842
    %v1844 = vpop.f32.mrb[0].mxu0
    %v1845 = vadd.f32 0.0, %v1844
    %v1846 = vpop.f32.mrb[0].mxu0
    %v1847 = vadd.f32 0.0, %v1846
    %1848 = vmatprep.mubr.bf16.mxu0 %v415
    %1849 = vmatmul.mubr.bf16.gmra.mrb[0].mxu0 %v414
    %v1850 = vpop.f32.mrb[0].mxu0
    %v1851 = vadd.f32 0.0, %v1850
    %v1852 = vpop.f32.mrb[0].mxu0
    %v1853 = vadd.f32 0.0, %v1852
    %v1854 = vpop.f32.mrb[0].mxu0
    %v1855 = vadd.f32 0.0, %v1854
    %v1856 = vpop.f32.mrb[0].mxu0
    %v1857 = vadd.f32 0.0, %v1856
    %1858 = vmatprep.mubr.bf16.mxu0 %v417
    %1859 = vmatmul.mubr.bf16.gmra.mrb[0].mxu0 %v416
    %v1860 = vpop.f32.mrb[0].mxu0
    %v1861 = vadd.f32 0.0, %v1860
    %v1862 = vpop.f32.mrb[0].mxu0
    %v1863 = vadd.f32 0.0, %v1862
    %v1864 = vpop.f32.mrb[0].mxu0
    %v1865 = vadd.f32 0.0, %v1864
    %v1866 = vpop.f32.mrb[0].mxu0
    %v1867 = vadd.f32 0.0, %v1866
    %1868 = vmatprep.mubr.bf16.mxu0 %v419
    %1869 = vmatmul.mubr.bf16.gmra.mrb[0].mxu0 %v418
    %v1870 = vpop.f32.mrb[0].mxu0
    %v1871 = vadd.f32 0.0, %v1870
    %v1872 = vpop.f32.mrb[0].mxu0
    %v1873 = vadd.f32 0.0, %v1872
    %v1874 = vpop.f32.mrb[0].mxu0
    %v1875 = vadd.f32 0.0, %v1874
    %v1876 = vpop.f32.mrb[0].mxu0
    %v1877 = vadd.f32 0.0, %v1876
    %1878 = vmatprep.mubr.bf16.mxu0 %v421
    %1879 = vmatmul.mubr.bf16.gmra.mrb[0].mxu0 %v420
    %v1880 = vpop.f32.mrb[0].mxu0
    %v1881 = vadd.f32 0.0, %v1880
    %v1882 = vpop.f32.mrb[0].mxu0
    %v1883 = vadd.f32 0.0, %v1882
    %v1884 = vpop.f32.mrb[0].mxu0
    %v1885 = vadd.f32 0.0, %v1884
    %v1886 = vpop.f32.mrb[0].mxu0
    %v1887 = vadd.f32 0.0, %v1886
    %1888 = vmatprep.mubr.bf16.mxu0 %v423
    %1889 = vmatmul.mubr.bf16.gmra.mrb[0].mxu0 %v422
    %v1890 = vpop.f32.mrb[0].mxu0
    %v1891 = vadd.f32 0.0, %v1890
    %v1892 = vpop.f32.mrb[0].mxu0
    %v1893 = vadd.f32 0.0, %v1892
    %v1894 = vpop.f32.mrb[0].mxu0
    %v1895 = vadd.f32 0.0, %v1894
    %v1896 = vpop.f32.mrb[0].mxu0
    %v1897 = vadd.f32 0.0, %v1896
    %1898 = vmatprep.mubr.bf16.mxu0 %v425
    %1899 = vmatmul.mubr.bf16.gmra.mrb[0].mxu0 %v424
    %v1900 = vpop.f32.mrb[0].mxu0
    %v1901 = vadd.f32 0.0, %v1900
    %v1902 = vpop.f32.mrb[0].mxu0
    %v1903 = vadd.f32 0.0, %v1902
    %v1904 = vpop.f32.mrb[0].mxu0
    %v1905 = vadd.f32 0.0, %v1904
    %v1906 = vpop.f32.mrb[0].mxu0
    %v1907 = vadd.f32 0.0, %v1906
    %1908 = vmatprep.mubr.bf16.mxu0 %v427
    %1909 = vmatmul.mubr.bf16.gmra.mrb[0].mxu0 %v426
    %v1910 = vpop.f32.mrb[0].mxu0
    %v1911 = vadd.f32 0.0, %v1910
    %v1912 = vpop.f32.mrb[0].mxu0
    %v1913 = vadd.f32 0.0, %v1912
    %v1914 = vpop.f32.mrb[0].mxu0
    %v1915 = vadd.f32 0.0, %v1914
    %v1916 = vpop.f32.mrb[0].mxu0
    %v1917 = vadd.f32 0.0, %v1916
    %1918 = vmatprep.mubr.bf16.mxu0 %v429
    %1919 = vmatmul.mubr.bf16.gmra.mrb[0].mxu0 %v428
    %v1920 = vpop.f32.mrb[0].mxu0
    %v1921 = vadd.f32 0.0, %v1920
    %v1922 = vpop.f32.mrb[0].mxu0
    %v1923 = vadd.f32 0.0, %v1922
    %v1924 = vpop.f32.mrb[0].mxu0
    %v1925 = vadd.f32 0.0, %v1924
    %v1926 = vpop.f32.mrb[0].mxu0
    %v1927 = vadd.f32 0.0, %v1926
    %1928 = vmatprep.mubr.bf16.mxu0 %v431
    %1929 = vmatmul.mubr.bf16.gmra.mrb[0].mxu0 %v430
    %v1930 = vpop.f32.mrb[0].mxu0
    %v1931 = vadd.f32 0.0, %v1930
    %v1932 = vpop.f32.mrb[0].mxu0
    %v1933 = vadd.f32 0.0, %v1932
    %v1934 = vpop.f32.mrb[0].mxu0
    %v1935 = vadd.f32 0.0, %v1934
    %v1936 = vpop.f32.mrb[0].mxu0
    %v1937 = vadd.f32 0.0, %v1936
    %1938 = vmatprep.mubr.bf16.mxu0 %v433
    %1939 = vmatmul.mubr.bf16.gmra.mrb[0].mxu0 %v432
    %v1940 = vpop.f32.mrb[0].mxu0
    %v1941 = vadd.f32 0.0, %v1940
    %v1942 = vpop.f32.mrb[0].mxu0
    %v1943 = vadd.f32 0.0, %v1942
    %v1944 = vpop.f32.mrb[0].mxu0
    %v1945 = vadd.f32 0.0, %v1944
    %v1946 = vpop.f32.mrb[0].mxu0
    %v1947 = vadd.f32 0.0, %v1946
    %1948 = vmatprep.mubr.bf16.mxu0 %v435
    %1949 = vmatmul.mubr.bf16.gmra.mrb[0].mxu0 %v434
    %v1950 = vpop.f32.mrb[0].mxu0
    %v1951 = vadd.f32 0.0, %v1950
    %v1952 = vpop.f32.mrb[0].mxu0
    %v1953 = vadd.f32 0.0, %v1952
    %v1954 = vpop.f32.mrb[0].mxu0
    %v1955 = vadd.f32 0.0, %v1954
    %v1956 = vpop.f32.mrb[0].mxu0
    %v1957 = vadd.f32 0.0, %v1956
    %1958 = vmatprep.mubr.bf16.mxu0 %v437
    %1959 = vmatmul.mubr.bf16.gmra.mrb[0].mxu0 %v436
    %v1960 = vpop.f32.mrb[0].mxu0
    %v1961 = vadd.f32 0.0, %v1960
    %v1962 = vpop.f32.mrb[0].mxu0
    %v1963 = vadd.f32 0.0, %v1962
    %v1964 = vpop.f32.mrb[0].mxu0
    %v1965 = vadd.f32 0.0, %v1964
    %v1966 = vpop.f32.mrb[0].mxu0
    %v1967 = vadd.f32 0.0, %v1966
    %1968 = vmatprep.mubr.bf16.mxu0 %v439
    %1969 = vmatmul.mubr.bf16.gmra.mrb[0].mxu0 %v438
    %v1970 = vpop.f32.mrb[0].mxu0
    %v1971 = vadd.f32 0.0, %v1970
    %v1972 = vpop.f32.mrb[0].mxu0
    %v1973 = vadd.f32 0.0, %v1972
    %v1974 = vpop.f32.mrb[0].mxu0
    %v1975 = vadd.f32 0.0, %v1974
    %v1976 = vpop.f32.mrb[0].mxu0
    %v1977 = vadd.f32 0.0, %v1976
    %1978 = vmatprep.mubr.bf16.mxu0 %v441
    %1979 = vmatmul.mubr.bf16.gmra.mrb[0].mxu0 %v440
    %v1980 = vpop.f32.mrb[0].mxu0
    %v1981 = vadd.f32 0.0, %v1980
    %v1982 = vpop.f32.mrb[0].mxu0
    %v1983 = vadd.f32 0.0, %v1982
    %v1984 = vpop.f32.mrb[0].mxu0
    %v1985 = vadd.f32 0.0, %v1984
    %v1986 = vpop.f32.mrb[0].mxu0
    %v1987 = vadd.f32 0.0, %v1986
    %1988 = vmatprep.mubr.bf16.mxu0 %v443
    %1989 = vmatmul.mubr.bf16.gmra.mrb[0].mxu0 %v442
    %v1990 = vpop.f32.mrb[0].mxu0
    %v1991 = vadd.f32 0.0, %v1990
    %v1992 = vpop.f32.mrb[0].mxu0
    %v1993 = vadd.f32 0.0, %v1992
    %v1994 = vpop.f32.mrb[0].mxu0
    %v1995 = vadd.f32 0.0, %v1994
    %v1996 = vpop.f32.mrb[0].mxu0
    %v1997 = vadd.f32 0.0, %v1996
    %1998 = vmatprep.mubr.bf16.mxu0 %v445
    %1999 = vmatmul.mubr.bf16.gmra.mrb[0].mxu0 %v444
    %v2000 = vpop.f32.mrb[0].mxu0
    %v2001 = vadd.f32 0.0, %v2000
    %v2002 = vpop.f32.mrb[0].mxu0
    %v2003 = vadd.f32 0.0, %v2002
    %v2004 = vpop.f32.mrb[0].mxu0
    %v2005 = vadd.f32 0.0, %v2004
    %v2006 = vpop.f32.mrb[0].mxu0
    %v2007 = vadd.f32 0.0, %v2006
    %2008 = vmatprep.mubr.bf16.mxu0 %v447
    %2009 = vmatmul.mubr.bf16.gmra.mrb[0].mxu0 %v446
    %v2010 = vpop.f32.mrb[0].mxu0
    %v2011 = vadd.f32 0.0, %v2010
    %v2012 = vpop.f32.mrb[0].mxu0
    %v2013 = vadd.f32 0.0, %v2012
    %v2014 = vpop.f32.mrb[0].mxu0
    %v2015 = vadd.f32 0.0, %v2014
    %v2016 = vpop.f32.mrb[0].mxu0
    %v2017 = vadd.f32 0.0, %v2016
    %2018 = vmatprep.mubr.bf16.mxu0 %v449
    %2019 = vmatmul.mubr.bf16.gmra.mrb[0].mxu0 %v448
    %v2020 = vpop.f32.mrb[0].mxu0
    %v2021 = vadd.f32 0.0, %v2020
    %v2022 = vpop.f32.mrb[0].mxu0
    %v2023 = vadd.f32 0.0, %v2022
    %v2024 = vpop.f32.mrb[0].mxu0
    %v2025 = vadd.f32 0.0, %v2024
    %v2026 = vpop.f32.mrb[0].mxu0
    %v2027 = vadd.f32 0.0, %v2026
    %2028 = vmatprep.mubr.bf16.mxu0 %v451
    %2029 = vmatmul.mubr.bf16.gmra.mrb[0].mxu0 %v450
    %v2030 = vpop.f32.mrb[0].mxu0
    %v2031 = vadd.f32 0.0, %v2030
    %v2032 = vpop.f32.mrb[0].mxu0
    %v2033 = vadd.f32 0.0, %v2032
    %v2034 = vpop.f32.mrb[0].mxu0
    %v2035 = vadd.f32 0.0, %v2034
    %v2036 = vpop.f32.mrb[0].mxu0
    %v2037 = vadd.f32 0.0, %v2036
    %2038 = vmatprep.mubr.bf16.mxu0 %v453
    %2039 = vmatmul.mubr.bf16.gmra.mrb[0].mxu0 %v452
    %v2040 = vpop.f32.mrb[0].mxu0
    %v2041 = vadd.f32 0.0, %v2040
    %v2042 = vpop.f32.mrb[0].mxu0
    %v2043 = vadd.f32 0.0, %v2042
    %v2044 = vpop.f32.mrb[0].mxu0
    %v2045 = vadd.f32 0.0, %v2044
    %v2046 = vpop.f32.mrb[0].mxu0
    %v2047 = vadd.f32 0.0, %v2046
    %2048 = vmatprep.mubr.bf16.mxu0 %v455
    %2049 = vmatmul.mubr.bf16.gmra.mrb[0].mxu0 %v454
    %v2050 = vpop.f32.mrb[0].mxu0
    %v2051 = vadd.f32 0.0, %v2050
    %v2052 = vpop.f32.mrb[0].mxu0
    %v2053 = vadd.f32 0.0, %v2052
    %v2054 = vpop.f32.mrb[0].mxu0
    %v2055 = vadd.f32 0.0, %v2054
    %v2056 = vpop.f32.mrb[0].mxu0
    %v2057 = vadd.f32 0.0, %v2056
    %2058 = vdwg.mxu0
    %v2059 = vpack.c.bf16 %v1039, %v1035
    %v2060 = vpack.c.bf16 %v1041, %v1037
    %v2061 = vpack.c.bf16 %v1392, %v1388
    %v2062 = vpack.c.bf16 %v1394, %v1390
    %v2063 = vpack.c.bf16 %v1745, %v1741
    %v2064 = vpack.c.bf16 %v1747, %v1743
    %v2065 = vpack.c.bf16 %v1049, %v1045
    %v2066 = vpack.c.bf16 %v1051, %v1047
    %v2067 = vpack.c.bf16 %v1402, %v1398
    %v2068 = vpack.c.bf16 %v1404, %v1400
    %v2069 = vpack.c.bf16 %v1755, %v1751
    %v2070 = vpack.c.bf16 %v1757, %v1753
    %v2071 = vpack.c.bf16 %v1059, %v1055
    %v2072 = vpack.c.bf16 %v1061, %v1057
    %v2073 = vpack.c.bf16 %v1412, %v1408
    %v2074 = vpack.c.bf16 %v1414, %v1410
    %v2075 = vpack.c.bf16 %v1765, %v1761
    %v2076 = vpack.c.bf16 %v1767, %v1763
    %v2077 = vpack.c.bf16 %v1069, %v1065
    %v2078 = vpack.c.bf16 %v1071, %v1067
    %v2079 = vpack.c.bf16 %v1422, %v1418
    %v2080 = vpack.c.bf16 %v1424, %v1420
    %v2081 = vpack.c.bf16 %v1775, %v1771
    %v2082 = vpack.c.bf16 %v1777, %v1773
    %v2083 = vpack.c.bf16 %v1079, %v1075
    %v2084 = vpack.c.bf16 %v1081, %v1077
    %v2085 = vpack.c.bf16 %v1432, %v1428
    %v2086 = vpack.c.bf16 %v1434, %v1430
    %v2087 = vpack.c.bf16 %v1785, %v1781
    %v2088 = vpack.c.bf16 %v1787, %v1783
    %v2089 = vpack.c.bf16 %v1089, %v1085
    %v2090 = vpack.c.bf16 %v1091, %v1087
    %v2091 = vpack.c.bf16 %v1442, %v1438
    %v2092 = vpack.c.bf16 %v1444, %v1440
    %v2093 = vpack.c.bf16 %v1795, %v1791
    %v2094 = vpack.c.bf16 %v1797, %v1793
    %v2095 = vpack.c.bf16 %v1099, %v1095
    %v2096 = vpack.c.bf16 %v1101, %v1097
    %v2097 = vpack.c.bf16 %v1452, %v1448
    %v2098 = vpack.c.bf16 %v1454, %v1450
    %v2099 = vpack.c.bf16 %v1805, %v1801
    %v2100 = vpack.c.bf16 %v1807, %v1803
    %v2101 = vpack.c.bf16 %v1109, %v1105
    %v2102 = vpack.c.bf16 %v1111, %v1107
    %v2103 = vpack.c.bf16 %v1462, %v1458
    %v2104 = vpack.c.bf16 %v1464, %v1460
    %v2105 = vpack.c.bf16 %v1815, %v1811
    %v2106 = vpack.c.bf16 %v1817, %v1813
    %v2107 = vpack.c.bf16 %v1119, %v1115
    %v2108 = vpack.c.bf16 %v1121, %v1117
    %v2109 = vpack.c.bf16 %v1472, %v1468
    %v2110 = vpack.c.bf16 %v1474, %v1470
    %v2111 = vpack.c.bf16 %v1825, %v1821
    %v2112 = vpack.c.bf16 %v1827, %v1823
    %v2113 = vpack.c.bf16 %v1129, %v1125
    %v2114 = vpack.c.bf16 %v1131, %v1127
    %v2115 = vpack.c.bf16 %v1482, %v1478
    %v2116 = vpack.c.bf16 %v1484, %v1480
    %v2117 = vpack.c.bf16 %v1835, %v1831
    %v2118 = vpack.c.bf16 %v1837, %v1833
    %v2119 = vpack.c.bf16 %v1139, %v1135
    %v2120 = vpack.c.bf16 %v1141, %v1137
    %v2121 = vpack.c.bf16 %v1492, %v1488
    %v2122 = vpack.c.bf16 %v1494, %v1490
    %v2123 = vpack.c.bf16 %v1845, %v1841
    %v2124 = vpack.c.bf16 %v1847, %v1843
    %v2125 = vpack.c.bf16 %v1149, %v1145
    %v2126 = vpack.c.bf16 %v1151, %v1147
    %v2127 = vpack.c.bf16 %v1502, %v1498
    %v2128 = vpack.c.bf16 %v1504, %v1500
    %v2129 = vpack.c.bf16 %v1855, %v1851
    %v2130 = vpack.c.bf16 %v1857, %v1853
    %v2131 = vpack.c.bf16 %v1159, %v1155
    %v2132 = vpack.c.bf16 %v1161, %v1157
    %v2133 = vpack.c.bf16 %v1512, %v1508
    %v2134 = vpack.c.bf16 %v1514, %v1510
    %v2135 = vpack.c.bf16 %v1865, %v1861
    %v2136 = vpack.c.bf16 %v1867, %v1863
    %v2137 = vpack.c.bf16 %v1169, %v1165
    %v2138 = vpack.c.bf16 %v1171, %v1167
    %v2139 = vpack.c.bf16 %v1522, %v1518
    %v2140 = vpack.c.bf16 %v1524, %v1520
    %v2141 = vpack.c.bf16 %v1875, %v1871
    %v2142 = vpack.c.bf16 %v1877, %v1873
    %v2143 = vpack.c.bf16 %v1179, %v1175
    %v2144 = vpack.c.bf16 %v1181, %v1177
    %v2145 = vpack.c.bf16 %v1532, %v1528
    %v2146 = vpack.c.bf16 %v1534, %v1530
    %v2147 = vpack.c.bf16 %v1885, %v1881
    %v2148 = vpack.c.bf16 %v1887, %v1883
    %v2149 = vpack.c.bf16 %v1189, %v1185
    %v2150 = vpack.c.bf16 %v1191, %v1187
    %v2151 = vpack.c.bf16 %v1542, %v1538
    %v2152 = vpack.c.bf16 %v1544, %v1540
    %v2153 = vpack.c.bf16 %v1895, %v1891
    %v2154 = vpack.c.bf16 %v1897, %v1893
    %v2155 = vpack.c.bf16 %v1199, %v1195
    %v2156 = vpack.c.bf16 %v1201, %v1197
    %v2157 = vpack.c.bf16 %v1552, %v1548
    %v2158 = vpack.c.bf16 %v1554, %v1550
    %v2159 = vpack.c.bf16 %v1905, %v1901
    %v2160 = vpack.c.bf16 %v1907, %v1903
    %v2161 = vpack.c.bf16 %v1209, %v1205
    %v2162 = vpack.c.bf16 %v1211, %v1207
    %v2163 = vpack.c.bf16 %v1562, %v1558
    %v2164 = vpack.c.bf16 %v1564, %v1560
    %v2165 = vpack.c.bf16 %v1915, %v1911
    %v2166 = vpack.c.bf16 %v1917, %v1913
    %v2167 = vpack.c.bf16 %v1219, %v1215
    %v2168 = vpack.c.bf16 %v1221, %v1217
    %v2169 = vpack.c.bf16 %v1572, %v1568
    %v2170 = vpack.c.bf16 %v1574, %v1570
    %v2171 = vpack.c.bf16 %v1925, %v1921
    %v2172 = vpack.c.bf16 %v1927, %v1923
    %v2173 = vpack.c.bf16 %v1229, %v1225
    %v2174 = vpack.c.bf16 %v1231, %v1227
    %v2175 = vpack.c.bf16 %v1582, %v1578
    %v2176 = vpack.c.bf16 %v1584, %v1580
    %v2177 = vpack.c.bf16 %v1935, %v1931
    %v2178 = vpack.c.bf16 %v1937, %v1933
    %v2179 = vpack.c.bf16 %v1239, %v1235
    %v2180 = vpack.c.bf16 %v1241, %v1237
    %v2181 = vpack.c.bf16 %v1592, %v1588
    %v2182 = vpack.c.bf16 %v1594, %v1590
    %v2183 = vpack.c.bf16 %v1945, %v1941
    %v2184 = vpack.c.bf16 %v1947, %v1943
    %v2185 = vpack.c.bf16 %v1249, %v1245
    %v2186 = vpack.c.bf16 %v1251, %v1247
    %v2187 = vpack.c.bf16 %v1602, %v1598
    %v2188 = vpack.c.bf16 %v1604, %v1600
    %v2189 = vpack.c.bf16 %v1955, %v1951
    %v2190 = vpack.c.bf16 %v1957, %v1953
    %v2191 = vpack.c.bf16 %v1259, %v1255
    %v2192 = vpack.c.bf16 %v1261, %v1257
    %v2193 = vpack.c.bf16 %v1612, %v1608
    %v2194 = vpack.c.bf16 %v1614, %v1610
    %v2195 = vpack.c.bf16 %v1965, %v1961
    %v2196 = vpack.c.bf16 %v1967, %v1963
    %v2197 = vpack.c.bf16 %v1269, %v1265
    %v2198 = vpack.c.bf16 %v1271, %v1267
    %v2199 = vpack.c.bf16 %v1622, %v1618
    %v2200 = vpack.c.bf16 %v1624, %v1620
    %v2201 = vpack.c.bf16 %v1975, %v1971
    %v2202 = vpack.c.bf16 %v1977, %v1973
    %v2203 = vpack.c.bf16 %v1279, %v1275
    %v2204 = vpack.c.bf16 %v1281, %v1277
    %v2205 = vpack.c.bf16 %v1632, %v1628
    %v2206 = vpack.c.bf16 %v1634, %v1630
    %v2207 = vpack.c.bf16 %v1985, %v1981
    %v2208 = vpack.c.bf16 %v1987, %v1983
    %v2209 = vpack.c.bf16 %v1289, %v1285
    %v2210 = vpack.c.bf16 %v1291, %v1287
    %v2211 = vpack.c.bf16 %v1642, %v1638
    %v2212 = vpack.c.bf16 %v1644, %v1640
    %v2213 = vpack.c.bf16 %v1995, %v1991
    %v2214 = vpack.c.bf16 %v1997, %v1993
    %v2215 = vpack.c.bf16 %v1299, %v1295
    %v2216 = vpack.c.bf16 %v1301, %v1297
    %v2217 = vpack.c.bf16 %v1652, %v1648
    %v2218 = vpack.c.bf16 %v1654, %v1650
    %v2219 = vpack.c.bf16 %v2005, %v2001
    %v2220 = vpack.c.bf16 %v2007, %v2003
    %v2221 = vpack.c.bf16 %v1309, %v1305
    %v2222 = vpack.c.bf16 %v1311, %v1307
    %v2223 = vpack.c.bf16 %v1662, %v1658
    %v2224 = vpack.c.bf16 %v1664, %v1660
    %v2225 = vpack.c.bf16 %v2015, %v2011
    %v2226 = vpack.c.bf16 %v2017, %v2013
    %v2227 = vpack.c.bf16 %v1319, %v1315
    %v2228 = vpack.c.bf16 %v1321, %v1317
    %v2229 = vpack.c.bf16 %v1672, %v1668
    %v2230 = vpack.c.bf16 %v1674, %v1670
    %v2231 = vpack.c.bf16 %v2025, %v2021
    %v2232 = vpack.c.bf16 %v2027, %v2023
    %v2233 = vpack.c.bf16 %v1329, %v1325
    %v2234 = vpack.c.bf16 %v1331, %v1327
    %v2235 = vpack.c.bf16 %v1682, %v1678
    %v2236 = vpack.c.bf16 %v1684, %v1680
    %v2237 = vpack.c.bf16 %v2035, %v2031
    %v2238 = vpack.c.bf16 %v2037, %v2033
    %v2239 = vpack.c.bf16 %v1339, %v1335
    %v2240 = vpack.c.bf16 %v1341, %v1337
    %v2241 = vpack.c.bf16 %v1692, %v1688
    %v2242 = vpack.c.bf16 %v1694, %v1690
    %v2243 = vpack.c.bf16 %v2045, %v2041
    %v2244 = vpack.c.bf16 %v2047, %v2043
    %v2245 = vpack.c.bf16 %v1349, %v1345
    %v2246 = vpack.c.bf16 %v1351, %v1347
    %v2247 = vpack.c.bf16 %v1702, %v1698
    %v2248 = vpack.c.bf16 %v1704, %v1700
    %v2249 = vpack.c.bf16 %v2055, %v2051
    %v2250 = vpack.c.bf16 %v2057, %v2053
    %v2443 = vunpack.c.l.b16 %v2059
    %v2444 = vunpack.c.l.b16 %v2060
    %v2445 = vunpack.c.l.b16 %v2061
    %v2446 = vunpack.c.l.b16 %v2062
    %v2447 = vunpack.c.l.b16 %v2063
    %v2448 = vunpack.c.l.b16 %v2064
    %v2449 = vunpack.c.h.b16 %v2059
    %v2450 = vunpack.c.h.b16 %v2060
    %v2451 = vunpack.c.h.b16 %v2061
    %v2452 = vunpack.c.h.b16 %v2062
    %v2453 = vunpack.c.h.b16 %v2063
    %v2454 = vunpack.c.h.b16 %v2064
    %v2455 = vunpack.c.l.b16 %v2065
    %v2456 = vunpack.c.l.b16 %v2066
    %v2457 = vunpack.c.l.b16 %v2067
    %v2458 = vunpack.c.l.b16 %v2068
    %v2459 = vunpack.c.l.b16 %v2069
    %v2460 = vunpack.c.l.b16 %v2070
    %v2461 = vunpack.c.h.b16 %v2065
    %v2462 = vunpack.c.h.b16 %v2066
    %v2463 = vunpack.c.h.b16 %v2067
    %v2464 = vunpack.c.h.b16 %v2068
    %v2465 = vunpack.c.h.b16 %v2069
    %v2466 = vunpack.c.h.b16 %v2070
    %v2467 = vunpack.c.l.b16 %v2071
    %v2468 = vunpack.c.l.b16 %v2072
    %v2469 = vunpack.c.l.b16 %v2073
    %v2470 = vunpack.c.l.b16 %v2074
    %v2471 = vunpack.c.l.b16 %v2075
    %v2472 = vunpack.c.l.b16 %v2076
    %v2473 = vunpack.c.h.b16 %v2071
    %v2474 = vunpack.c.h.b16 %v2072
    %v2475 = vunpack.c.h.b16 %v2073
    %v2476 = vunpack.c.h.b16 %v2074
    %v2477 = vunpack.c.h.b16 %v2075
    %v2478 = vunpack.c.h.b16 %v2076
    %v2479 = vunpack.c.l.b16 %v2077
    %v2480 = vunpack.c.l.b16 %v2078
    %v2481 = vunpack.c.l.b16 %v2079
    %v2482 = vunpack.c.l.b16 %v2080
    %v2483 = vunpack.c.l.b16 %v2081
    %v2484 = vunpack.c.l.b16 %v2082
    %v2485 = vunpack.c.h.b16 %v2077
    %v2486 = vunpack.c.h.b16 %v2078
    %v2487 = vunpack.c.h.b16 %v2079
    %v2488 = vunpack.c.h.b16 %v2080
    %v2489 = vunpack.c.h.b16 %v2081
    %v2490 = vunpack.c.h.b16 %v2082
    %v2491 = vunpack.c.l.b16 %v2083
    %v2492 = vunpack.c.l.b16 %v2084
    %v2493 = vunpack.c.l.b16 %v2085
    %v2494 = vunpack.c.l.b16 %v2086
    %v2495 = vunpack.c.l.b16 %v2087
    %v2496 = vunpack.c.l.b16 %v2088
    %v2497 = vunpack.c.h.b16 %v2083
    %v2498 = vunpack.c.h.b16 %v2084
    %v2499 = vunpack.c.h.b16 %v2085
    %v2500 = vunpack.c.h.b16 %v2086
    %v2501 = vunpack.c.h.b16 %v2087
    %v2502 = vunpack.c.h.b16 %v2088
    %v2503 = vunpack.c.l.b16 %v2089
    %v2504 = vunpack.c.l.b16 %v2090
    %v2505 = vunpack.c.l.b16 %v2091
    %v2506 = vunpack.c.l.b16 %v2092
    %v2507 = vunpack.c.l.b16 %v2093
    %v2508 = vunpack.c.l.b16 %v2094
    %v2509 = vunpack.c.h.b16 %v2089
    %v2510 = vunpack.c.h.b16 %v2090
    %v2511 = vunpack.c.h.b16 %v2091
    %v2512 = vunpack.c.h.b16 %v2092
    %v2513 = vunpack.c.h.b16 %v2093
    %v2514 = vunpack.c.h.b16 %v2094
    %v2515 = vunpack.c.l.b16 %v2095
    %v2516 = vunpack.c.l.b16 %v2096
    %v2517 = vunpack.c.l.b16 %v2097
    %v2518 = vunpack.c.l.b16 %v2098
    %v2519 = vunpack.c.l.b16 %v2099
    %v2520 = vunpack.c.l.b16 %v2100
    %v2521 = vunpack.c.h.b16 %v2095
    %v2522 = vunpack.c.h.b16 %v2096
    %v2523 = vunpack.c.h.b16 %v2097
    %v2524 = vunpack.c.h.b16 %v2098
    %v2525 = vunpack.c.h.b16 %v2099
    %v2526 = vunpack.c.h.b16 %v2100
    %v2527 = vunpack.c.l.b16 %v2101
    %v2528 = vunpack.c.l.b16 %v2102
    %v2529 = vunpack.c.l.b16 %v2103
    %v2530 = vunpack.c.l.b16 %v2104
    %v2531 = vunpack.c.l.b16 %v2105
    %v2532 = vunpack.c.l.b16 %v2106
    %v2533 = vunpack.c.h.b16 %v2101
    %v2534 = vunpack.c.h.b16 %v2102
    %v2535 = vunpack.c.h.b16 %v2103
    %v2536 = vunpack.c.h.b16 %v2104
    %v2537 = vunpack.c.h.b16 %v2105
    %v2538 = vunpack.c.h.b16 %v2106
    %v2539 = vunpack.c.l.b16 %v2107
    %v2540 = vunpack.c.l.b16 %v2108
    %v2541 = vunpack.c.l.b16 %v2109
    %v2542 = vunpack.c.l.b16 %v2110
    %v2543 = vunpack.c.l.b16 %v2111
    %v2544 = vunpack.c.l.b16 %v2112
    %v2545 = vunpack.c.h.b16 %v2107
    %v2546 = vunpack.c.h.b16 %v2108
    %v2547 = vunpack.c.h.b16 %v2109
    %v2548 = vunpack.c.h.b16 %v2110
    %v2549 = vunpack.c.h.b16 %v2111
    %v2550 = vunpack.c.h.b16 %v2112
    %v2551 = vunpack.c.l.b16 %v2113
    %v2552 = vunpack.c.l.b16 %v2114
    %v2553 = vunpack.c.l.b16 %v2115
    %v2554 = vunpack.c.l.b16 %v2116
    %v2555 = vunpack.c.l.b16 %v2117
    %v2556 = vunpack.c.l.b16 %v2118
    %v2557 = vunpack.c.h.b16 %v2113
    %v2558 = vunpack.c.h.b16 %v2114
    %v2559 = vunpack.c.h.b16 %v2115
    %v2560 = vunpack.c.h.b16 %v2116
    %v2561 = vunpack.c.h.b16 %v2117
    %v2562 = vunpack.c.h.b16 %v2118
    %v2563 = vunpack.c.l.b16 %v2119
    %v2564 = vunpack.c.l.b16 %v2120
    %v2565 = vunpack.c.l.b16 %v2121
    %v2566 = vunpack.c.l.b16 %v2122
    %v2567 = vunpack.c.l.b16 %v2123
    %v2568 = vunpack.c.l.b16 %v2124
    %v2569 = vunpack.c.h.b16 %v2119
    %v2570 = vunpack.c.h.b16 %v2120
    %v2571 = vunpack.c.h.b16 %v2121
    %v2572 = vunpack.c.h.b16 %v2122
    %v2573 = vunpack.c.h.b16 %v2123
    %v2574 = vunpack.c.h.b16 %v2124
    %v2575 = vunpack.c.l.b16 %v2125
    %v2576 = vunpack.c.l.b16 %v2126
    %v2577 = vunpack.c.l.b16 %v2127
    %v2578 = vunpack.c.l.b16 %v2128
    %v2579 = vunpack.c.l.b16 %v2129
    %v2580 = vunpack.c.l.b16 %v2130
    %v2581 = vunpack.c.h.b16 %v2125
    %v2582 = vunpack.c.h.b16 %v2126
    %v2583 = vunpack.c.h.b16 %v2127
    %v2584 = vunpack.c.h.b16 %v2128
    %v2585 = vunpack.c.h.b16 %v2129
    %v2586 = vunpack.c.h.b16 %v2130
    %v2587 = vunpack.c.l.b16 %v2131
    %v2588 = vunpack.c.l.b16 %v2132
    %v2589 = vunpack.c.l.b16 %v2133
    %v2590 = vunpack.c.l.b16 %v2134
    %v2591 = vunpack.c.l.b16 %v2135
    %v2592 = vunpack.c.l.b16 %v2136
    %v2593 = vunpack.c.h.b16 %v2131
    %v2594 = vunpack.c.h.b16 %v2132
    %v2595 = vunpack.c.h.b16 %v2133
    %v2596 = vunpack.c.h.b16 %v2134
    %v2597 = vunpack.c.h.b16 %v2135
    %v2598 = vunpack.c.h.b16 %v2136
    %v2599 = vunpack.c.l.b16 %v2137
    %v2600 = vunpack.c.l.b16 %v2138
    %v2601 = vunpack.c.l.b16 %v2139
    %v2602 = vunpack.c.l.b16 %v2140
    %v2603 = vunpack.c.l.b16 %v2141
    %v2604 = vunpack.c.l.b16 %v2142
    %v2605 = vunpack.c.h.b16 %v2137
    %v2606 = vunpack.c.h.b16 %v2138
    %v2607 = vunpack.c.h.b16 %v2139
    %v2608 = vunpack.c.h.b16 %v2140
    %v2609 = vunpack.c.h.b16 %v2141
    %v2610 = vunpack.c.h.b16 %v2142
    %v2611 = vunpack.c.l.b16 %v2143
    %v2612 = vunpack.c.l.b16 %v2144
    %v2613 = vunpack.c.l.b16 %v2145
    %v2614 = vunpack.c.l.b16 %v2146
    %v2615 = vunpack.c.l.b16 %v2147
    %v2616 = vunpack.c.l.b16 %v2148
    %v2617 = vunpack.c.h.b16 %v2143
    %v2618 = vunpack.c.h.b16 %v2144
    %v2619 = vunpack.c.h.b16 %v2145
    %v2620 = vunpack.c.h.b16 %v2146
    %v2621 = vunpack.c.h.b16 %v2147
    %v2622 = vunpack.c.h.b16 %v2148
    %v2623 = vunpack.c.l.b16 %v2149
    %v2624 = vunpack.c.l.b16 %v2150
    %v2625 = vunpack.c.l.b16 %v2151
    %v2626 = vunpack.c.l.b16 %v2152
    %v2627 = vunpack.c.l.b16 %v2153
    %v2628 = vunpack.c.l.b16 %v2154
    %v2629 = vunpack.c.h.b16 %v2149
    %v2630 = vunpack.c.h.b16 %v2150
    %v2631 = vunpack.c.h.b16 %v2151
    %v2632 = vunpack.c.h.b16 %v2152
    %v2633 = vunpack.c.h.b16 %v2153
    %v2634 = vunpack.c.h.b16 %v2154
    %v2635 = vunpack.c.l.b16 %v2155
    %v2636 = vunpack.c.l.b16 %v2156
    %v2637 = vunpack.c.l.b16 %v2157
    %v2638 = vunpack.c.l.b16 %v2158
    %v2639 = vunpack.c.l.b16 %v2159
    %v2640 = vunpack.c.l.b16 %v2160
    %v2641 = vunpack.c.h.b16 %v2155
    %v2642 = vunpack.c.h.b16 %v2156
    %v2643 = vunpack.c.h.b16 %v2157
    %v2644 = vunpack.c.h.b16 %v2158
    %v2645 = vunpack.c.h.b16 %v2159
    %v2646 = vunpack.c.h.b16 %v2160
    %v2647 = vunpack.c.l.b16 %v2161
    %v2648 = vunpack.c.l.b16 %v2162
    %v2649 = vunpack.c.l.b16 %v2163
    %v2650 = vunpack.c.l.b16 %v2164
    %v2651 = vunpack.c.l.b16 %v2165
    %v2652 = vunpack.c.l.b16 %v2166
    %v2653 = vunpack.c.h.b16 %v2161
    %v2654 = vunpack.c.h.b16 %v2162
    %v2655 = vunpack.c.h.b16 %v2163
    %v2656 = vunpack.c.h.b16 %v2164
    %v2657 = vunpack.c.h.b16 %v2165
    %v2658 = vunpack.c.h.b16 %v2166
    %v2659 = vunpack.c.l.b16 %v2167
    %v2660 = vunpack.c.l.b16 %v2168
    %v2661 = vunpack.c.l.b16 %v2169
    %v2662 = vunpack.c.l.b16 %v2170
    %v2663 = vunpack.c.l.b16 %v2171
    %v2664 = vunpack.c.l.b16 %v2172
    %v2665 = vunpack.c.h.b16 %v2167
    %v2666 = vunpack.c.h.b16 %v2168
    %v2667 = vunpack.c.h.b16 %v2169
    %v2668 = vunpack.c.h.b16 %v2170
    %v2669 = vunpack.c.h.b16 %v2171
    %v2670 = vunpack.c.h.b16 %v2172
    %v2671 = vunpack.c.l.b16 %v2173
    %v2672 = vunpack.c.l.b16 %v2174
    %v2673 = vunpack.c.l.b16 %v2175
    %v2674 = vunpack.c.l.b16 %v2176
    %v2675 = vunpack.c.l.b16 %v2177
    %v2676 = vunpack.c.l.b16 %v2178
    %v2677 = vunpack.c.h.b16 %v2173
    %v2678 = vunpack.c.h.b16 %v2174
    %v2679 = vunpack.c.h.b16 %v2175
    %v2680 = vunpack.c.h.b16 %v2176
    %v2681 = vunpack.c.h.b16 %v2177
    %v2682 = vunpack.c.h.b16 %v2178
    %v2683 = vunpack.c.l.b16 %v2179
    %v2684 = vunpack.c.l.b16 %v2180
    %v2685 = vunpack.c.l.b16 %v2181
    %v2686 = vunpack.c.l.b16 %v2182
    %v2687 = vunpack.c.l.b16 %v2183
    %v2688 = vunpack.c.l.b16 %v2184
    %v2689 = vunpack.c.h.b16 %v2179
    %v2690 = vunpack.c.h.b16 %v2180
    %v2691 = vunpack.c.h.b16 %v2181
    %v2692 = vunpack.c.h.b16 %v2182
    %v2693 = vunpack.c.h.b16 %v2183
    %v2694 = vunpack.c.h.b16 %v2184
    %v2695 = vunpack.c.l.b16 %v2185
    %v2696 = vunpack.c.l.b16 %v2186
    %v2697 = vunpack.c.l.b16 %v2187
    %v2698 = vunpack.c.l.b16 %v2188
    %v2699 = vunpack.c.l.b16 %v2189
    %v2700 = vunpack.c.l.b16 %v2190
    %v2701 = vunpack.c.h.b16 %v2185
    %v2702 = vunpack.c.h.b16 %v2186
    %v2703 = vunpack.c.h.b16 %v2187
    %v2704 = vunpack.c.h.b16 %v2188
    %v2705 = vunpack.c.h.b16 %v2189
    %v2706 = vunpack.c.h.b16 %v2190
    %v2707 = vunpack.c.l.b16 %v2191
    %v2708 = vunpack.c.l.b16 %v2192
    %v2709 = vunpack.c.l.b16 %v2193
    %v2710 = vunpack.c.l.b16 %v2194
    %v2711 = vunpack.c.l.b16 %v2195
    %v2712 = vunpack.c.l.b16 %v2196
    %v2713 = vunpack.c.h.b16 %v2191
    %v2714 = vunpack.c.h.b16 %v2192
    %v2715 = vunpack.c.h.b16 %v2193
    %v2716 = vunpack.c.h.b16 %v2194
    %v2717 = vunpack.c.h.b16 %v2195
    %v2718 = vunpack.c.h.b16 %v2196
    %v2719 = vunpack.c.l.b16 %v2197
    %v2720 = vunpack.c.l.b16 %v2198
    %v2721 = vunpack.c.l.b16 %v2199
    %v2722 = vunpack.c.l.b16 %v2200
    %v2723 = vunpack.c.l.b16 %v2201
    %v2724 = vunpack.c.l.b16 %v2202
    %v2725 = vunpack.c.h.b16 %v2197
    %v2726 = vunpack.c.h.b16 %v2198
    %v2727 = vunpack.c.h.b16 %v2199
    %v2728 = vunpack.c.h.b16 %v2200
    %v2729 = vunpack.c.h.b16 %v2201
    %v2730 = vunpack.c.h.b16 %v2202
    %v2731 = vunpack.c.l.b16 %v2203
    %v2732 = vunpack.c.l.b16 %v2204
    %v2733 = vunpack.c.l.b16 %v2205
    %v2734 = vunpack.c.l.b16 %v2206
    %v2735 = vunpack.c.l.b16 %v2207
    %v2736 = vunpack.c.l.b16 %v2208
    %v2737 = vunpack.c.h.b16 %v2203
    %v2738 = vunpack.c.h.b16 %v2204
    %v2739 = vunpack.c.h.b16 %v2205
    %v2740 = vunpack.c.h.b16 %v2206
    %v2741 = vunpack.c.h.b16 %v2207
    %v2742 = vunpack.c.h.b16 %v2208
    %v2743 = vunpack.c.l.b16 %v2209
    %v2744 = vunpack.c.l.b16 %v2210
    %v2745 = vunpack.c.l.b16 %v2211
    %v2746 = vunpack.c.l.b16 %v2212
    %v2747 = vunpack.c.l.b16 %v2213
    %v2748 = vunpack.c.l.b16 %v2214
    %v2749 = vunpack.c.h.b16 %v2209
    %v2750 = vunpack.c.h.b16 %v2210
    %v2751 = vunpack.c.h.b16 %v2211
    %v2752 = vunpack.c.h.b16 %v2212
    %v2753 = vunpack.c.h.b16 %v2213
    %v2754 = vunpack.c.h.b16 %v2214
    %v2755 = vunpack.c.l.b16 %v2215
    %v2756 = vunpack.c.l.b16 %v2216
    %v2757 = vunpack.c.l.b16 %v2217
    %v2758 = vunpack.c.l.b16 %v2218
    %v2759 = vunpack.c.l.b16 %v2219
    %v2760 = vunpack.c.l.b16 %v2220
    %v2761 = vunpack.c.h.b16 %v2215
    %v2762 = vunpack.c.h.b16 %v2216
    %v2763 = vunpack.c.h.b16 %v2217
    %v2764 = vunpack.c.h.b16 %v2218
    %v2765 = vunpack.c.h.b16 %v2219
    %v2766 = vunpack.c.h.b16 %v2220
    %v2767 = vunpack.c.l.b16 %v2221
    %v2768 = vunpack.c.l.b16 %v2222
    %v2769 = vunpack.c.l.b16 %v2223
    %v2770 = vunpack.c.l.b16 %v2224
    %v2771 = vunpack.c.l.b16 %v2225
    %v2772 = vunpack.c.l.b16 %v2226
    %v2773 = vunpack.c.h.b16 %v2221
    %v2774 = vunpack.c.h.b16 %v2222
    %v2775 = vunpack.c.h.b16 %v2223
    %v2776 = vunpack.c.h.b16 %v2224
    %v2777 = vunpack.c.h.b16 %v2225
    %v2778 = vunpack.c.h.b16 %v2226
    %v2779 = vunpack.c.l.b16 %v2227
    %v2780 = vunpack.c.l.b16 %v2228
    %v2781 = vunpack.c.l.b16 %v2229
    %v2782 = vunpack.c.l.b16 %v2230
    %v2783 = vunpack.c.l.b16 %v2231
    %v2784 = vunpack.c.l.b16 %v2232
    %v2785 = vunpack.c.h.b16 %v2227
    %v2786 = vunpack.c.h.b16 %v2228
    %v2787 = vunpack.c.h.b16 %v2229
    %v2788 = vunpack.c.h.b16 %v2230
    %v2789 = vunpack.c.h.b16 %v2231
    %v2790 = vunpack.c.h.b16 %v2232
    %v2791 = vunpack.c.l.b16 %v2233
    %v2792 = vunpack.c.l.b16 %v2234
    %v2793 = vunpack.c.l.b16 %v2235
    %v2794 = vunpack.c.l.b16 %v2236
    %v2795 = vunpack.c.l.b16 %v2237
    %v2796 = vunpack.c.l.b16 %v2238
    %v2797 = vunpack.c.h.b16 %v2233
    %v2798 = vunpack.c.h.b16 %v2234
    %v2799 = vunpack.c.h.b16 %v2235
    %v2800 = vunpack.c.h.b16 %v2236
    %v2801 = vunpack.c.h.b16 %v2237
    %v2802 = vunpack.c.h.b16 %v2238
    %v2803 = vunpack.c.l.b16 %v2239
    %v2804 = vunpack.c.l.b16 %v2240
    %v2805 = vunpack.c.l.b16 %v2241
    %v2806 = vunpack.c.l.b16 %v2242
    %v2807 = vunpack.c.l.b16 %v2243
    %v2808 = vunpack.c.l.b16 %v2244
    %v2809 = vunpack.c.h.b16 %v2239
    %v2810 = vunpack.c.h.b16 %v2240
    %v2811 = vunpack.c.h.b16 %v2241
    %v2812 = vunpack.c.h.b16 %v2242
    %v2813 = vunpack.c.h.b16 %v2243
    %v2814 = vunpack.c.h.b16 %v2244
    %v2815 = vunpack.c.l.b16 %v2245
    %v2816 = vunpack.c.l.b16 %v2246
    %v2817 = vunpack.c.l.b16 %v2247
    %v2818 = vunpack.c.l.b16 %v2248
    %v2819 = vunpack.c.l.b16 %v2249
    %v2820 = vunpack.c.l.b16 %v2250
    %v2821 = vunpack.c.h.b16 %v2245
    %v2822 = vunpack.c.h.b16 %v2246
    %v2823 = vunpack.c.h.b16 %v2247
    %v2824 = vunpack.c.h.b16 %v2248
    %v2825 = vunpack.c.h.b16 %v2249
    %v2826 = vunpack.c.h.b16 %v2250
    %v2827 = vpack.c.b16 %v2444, %v2443
    %v2828 = vpack.c.b16 %v2446, %v2445
    %v2829 = vpack.c.b16 %v2448, %v2447
    %v2830 = vpack.c.b16 %v2450, %v2449
    %v2831 = vpack.c.b16 %v2452, %v2451
    %v2832 = vpack.c.b16 %v2454, %v2453
    %v2833 = vpack.c.b16 %v2456, %v2455
    %v2834 = vpack.c.b16 %v2458, %v2457
    %v2835 = vpack.c.b16 %v2460, %v2459
    %v2836 = vpack.c.b16 %v2462, %v2461
    %v2837 = vpack.c.b16 %v2464, %v2463
    %v2838 = vpack.c.b16 %v2466, %v2465
    %v2839 = vpack.c.b16 %v2468, %v2467
    %v2840 = vpack.c.b16 %v2470, %v2469
    %v2841 = vpack.c.b16 %v2472, %v2471
    %v2842 = vpack.c.b16 %v2474, %v2473
    %v2843 = vpack.c.b16 %v2476, %v2475
    %v2844 = vpack.c.b16 %v2478, %v2477
    %v2845 = vpack.c.b16 %v2480, %v2479
    %v2846 = vpack.c.b16 %v2482, %v2481
    %v2847 = vpack.c.b16 %v2484, %v2483
    %v2848 = vpack.c.b16 %v2486, %v2485
    %v2849 = vpack.c.b16 %v2488, %v2487
    %v2850 = vpack.c.b16 %v2490, %v2489
    %v2851 = vpack.c.b16 %v2492, %v2491
    %v2852 = vpack.c.b16 %v2494, %v2493
    %v2853 = vpack.c.b16 %v2496, %v2495
    %v2854 = vpack.c.b16 %v2498, %v2497
    %v2855 = vpack.c.b16 %v2500, %v2499
    %v2856 = vpack.c.b16 %v2502, %v2501
    %v2857 = vpack.c.b16 %v2504, %v2503
    %v2858 = vpack.c.b16 %v2506, %v2505
    %v2859 = vpack.c.b16 %v2508, %v2507
    %v2860 = vpack.c.b16 %v2510, %v2509
    %v2861 = vpack.c.b16 %v2512, %v2511
    %v2862 = vpack.c.b16 %v2514, %v2513
    %v2863 = vpack.c.b16 %v2516, %v2515
    %v2864 = vpack.c.b16 %v2518, %v2517
    %v2865 = vpack.c.b16 %v2520, %v2519
    %v2866 = vpack.c.b16 %v2522, %v2521
    %v2867 = vpack.c.b16 %v2524, %v2523
    %v2868 = vpack.c.b16 %v2526, %v2525
    %v2869 = vpack.c.b16 %v2528, %v2527
    %v2870 = vpack.c.b16 %v2530, %v2529
    %v2871 = vpack.c.b16 %v2532, %v2531
    %v2872 = vpack.c.b16 %v2534, %v2533
    %v2873 = vpack.c.b16 %v2536, %v2535
    %v2874 = vpack.c.b16 %v2538, %v2537
    %v2875 = vpack.c.b16 %v2540, %v2539
    %v2876 = vpack.c.b16 %v2542, %v2541
    %v2877 = vpack.c.b16 %v2544, %v2543
    %v2878 = vpack.c.b16 %v2546, %v2545
    %v2879 = vpack.c.b16 %v2548, %v2547
    %v2880 = vpack.c.b16 %v2550, %v2549
    %v2881 = vpack.c.b16 %v2552, %v2551
    %v2882 = vpack.c.b16 %v2554, %v2553
    %v2883 = vpack.c.b16 %v2556, %v2555
    %v2884 = vpack.c.b16 %v2558, %v2557
    %v2885 = vpack.c.b16 %v2560, %v2559
    %v2886 = vpack.c.b16 %v2562, %v2561
    %v2887 = vpack.c.b16 %v2564, %v2563
    %v2888 = vpack.c.b16 %v2566, %v2565
    %v2889 = vpack.c.b16 %v2568, %v2567
    %v2890 = vpack.c.b16 %v2570, %v2569
    %v2891 = vpack.c.b16 %v2572, %v2571
    %v2892 = vpack.c.b16 %v2574, %v2573
    %v2893 = vpack.c.b16 %v2576, %v2575
    %v2894 = vpack.c.b16 %v2578, %v2577
    %v2895 = vpack.c.b16 %v2580, %v2579
    %v2896 = vpack.c.b16 %v2582, %v2581
    %v2897 = vpack.c.b16 %v2584, %v2583
    %v2898 = vpack.c.b16 %v2586, %v2585
    %v2899 = vpack.c.b16 %v2588, %v2587
    %v2900 = vpack.c.b16 %v2590, %v2589
    %v2901 = vpack.c.b16 %v2592, %v2591
    %v2902 = vpack.c.b16 %v2594, %v2593
    %v2903 = vpack.c.b16 %v2596, %v2595
    %v2904 = vpack.c.b16 %v2598, %v2597
    %v2905 = vpack.c.b16 %v2600, %v2599
    %v2906 = vpack.c.b16 %v2602, %v2601
    %v2907 = vpack.c.b16 %v2604, %v2603
    %v2908 = vpack.c.b16 %v2606, %v2605
    %v2909 = vpack.c.b16 %v2608, %v2607
    %v2910 = vpack.c.b16 %v2610, %v2609
    %v2911 = vpack.c.b16 %v2612, %v2611
    %v2912 = vpack.c.b16 %v2614, %v2613
    %v2913 = vpack.c.b16 %v2616, %v2615
    %v2914 = vpack.c.b16 %v2618, %v2617
    %v2915 = vpack.c.b16 %v2620, %v2619
    %v2916 = vpack.c.b16 %v2622, %v2621
    %v2917 = vpack.c.b16 %v2624, %v2623
    %v2918 = vpack.c.b16 %v2626, %v2625
    %v2919 = vpack.c.b16 %v2628, %v2627
    %v2920 = vpack.c.b16 %v2630, %v2629
    %v2921 = vpack.c.b16 %v2632, %v2631
    %v2922 = vpack.c.b16 %v2634, %v2633
    %v2923 = vpack.c.b16 %v2636, %v2635
    %v2924 = vpack.c.b16 %v2638, %v2637
    %v2925 = vpack.c.b16 %v2640, %v2639
    %v2926 = vpack.c.b16 %v2642, %v2641
    %v2927 = vpack.c.b16 %v2644, %v2643
    %v2928 = vpack.c.b16 %v2646, %v2645
    %v2929 = vpack.c.b16 %v2648, %v2647
    %v2930 = vpack.c.b16 %v2650, %v2649
    %v2931 = vpack.c.b16 %v2652, %v2651
    %v2932 = vpack.c.b16 %v2654, %v2653
    %v2933 = vpack.c.b16 %v2656, %v2655
    %v2934 = vpack.c.b16 %v2658, %v2657
    %v2935 = vpack.c.b16 %v2660, %v2659
    %v2936 = vpack.c.b16 %v2662, %v2661
    %v2937 = vpack.c.b16 %v2664, %v2663
    %v2938 = vpack.c.b16 %v2666, %v2665
    %v2939 = vpack.c.b16 %v2668, %v2667
    %v2940 = vpack.c.b16 %v2670, %v2669
    %v2941 = vpack.c.b16 %v2672, %v2671
    %v2942 = vpack.c.b16 %v2674, %v2673
    %v2943 = vpack.c.b16 %v2676, %v2675
    %v2944 = vpack.c.b16 %v2678, %v2677
    %v2945 = vpack.c.b16 %v2680, %v2679
    %v2946 = vpack.c.b16 %v2682, %v2681
    %v2947 = vpack.c.b16 %v2684, %v2683
    %v2948 = vpack.c.b16 %v2686, %v2685
    %v2949 = vpack.c.b16 %v2688, %v2687
    %v2950 = vpack.c.b16 %v2690, %v2689
    %v2951 = vpack.c.b16 %v2692, %v2691
    %v2952 = vpack.c.b16 %v2694, %v2693
    %v2953 = vpack.c.b16 %v2696, %v2695
    %v2954 = vpack.c.b16 %v2698, %v2697
    %v2955 = vpack.c.b16 %v2700, %v2699
    %v2956 = vpack.c.b16 %v2702, %v2701
    %v2957 = vpack.c.b16 %v2704, %v2703
    %v2958 = vpack.c.b16 %v2706, %v2705
    %v2959 = vpack.c.b16 %v2708, %v2707
    %v2960 = vpack.c.b16 %v2710, %v2709
    %v2961 = vpack.c.b16 %v2712, %v2711
    %v2962 = vpack.c.b16 %v2714, %v2713
    %v2963 = vpack.c.b16 %v2716, %v2715
    %v2964 = vpack.c.b16 %v2718, %v2717
    %v2965 = vpack.c.b16 %v2720, %v2719
    %v2966 = vpack.c.b16 %v2722, %v2721
    %v2967 = vpack.c.b16 %v2724, %v2723
    %v2968 = vpack.c.b16 %v2726, %v2725
    %v2969 = vpack.c.b16 %v2728, %v2727
    %v2970 = vpack.c.b16 %v2730, %v2729
    %v2971 = vpack.c.b16 %v2732, %v2731
    %v2972 = vpack.c.b16 %v2734, %v2733
    %v2973 = vpack.c.b16 %v2736, %v2735
    %v2974 = vpack.c.b16 %v2738, %v2737
    %v2975 = vpack.c.b16 %v2740, %v2739
    %v2976 = vpack.c.b16 %v2742, %v2741
    %v2977 = vpack.c.b16 %v2744, %v2743
    %v2978 = vpack.c.b16 %v2746, %v2745
    %v2979 = vpack.c.b16 %v2748, %v2747
    %v2980 = vpack.c.b16 %v2750, %v2749
    %v2981 = vpack.c.b16 %v2752, %v2751
    %v2982 = vpack.c.b16 %v2754, %v2753
    %v2983 = vpack.c.b16 %v2756, %v2755
    %v2984 = vpack.c.b16 %v2758, %v2757
    %v2985 = vpack.c.b16 %v2760, %v2759
    %v2986 = vpack.c.b16 %v2762, %v2761
    %v2987 = vpack.c.b16 %v2764, %v2763
    %v2988 = vpack.c.b16 %v2766, %v2765
    %v2989 = vpack.c.b16 %v2768, %v2767
    %v2990 = vpack.c.b16 %v2770, %v2769
    %v2991 = vpack.c.b16 %v2772, %v2771
    %v2992 = vpack.c.b16 %v2774, %v2773
    %v2993 = vpack.c.b16 %v2776, %v2775
    %v2994 = vpack.c.b16 %v2778, %v2777
    %v2995 = vpack.c.b16 %v2780, %v2779
    %v2996 = vpack.c.b16 %v2782, %v2781
    %v2997 = vpack.c.b16 %v2784, %v2783
    %v2998 = vpack.c.b16 %v2786, %v2785
    %v2999 = vpack.c.b16 %v2788, %v2787
    %v3000 = vpack.c.b16 %v2790, %v2789
    %v3001 = vpack.c.b16 %v2792, %v2791
    %v3002 = vpack.c.b16 %v2794, %v2793
    %v3003 = vpack.c.b16 %v2796, %v2795
    %v3004 = vpack.c.b16 %v2798, %v2797
    %v3005 = vpack.c.b16 %v2800, %v2799
    %v3006 = vpack.c.b16 %v2802, %v2801
    %v3007 = vpack.c.b16 %v2804, %v2803
    %v3008 = vpack.c.b16 %v2806, %v2805
    %v3009 = vpack.c.b16 %v2808, %v2807
    %v3010 = vpack.c.b16 %v2810, %v2809
    %v3011 = vpack.c.b16 %v2812, %v2811
    %v3012 = vpack.c.b16 %v2814, %v2813
    %v3013 = vpack.c.b16 %v2816, %v2815
    %v3014 = vpack.c.b16 %v2818, %v2817
    %v3015 = vpack.c.b16 %v2820, %v2819
    %v3016 = vpack.c.b16 %v2822, %v2821
    %v3017 = vpack.c.b16 %v2824, %v2823
    %v3018 = vpack.c.b16 %v2826, %v2825
    %3211 = vst [vmem:[#allocation7] sm:$0xff] %v2827
    %3212 = vst [vmem:[#allocation7 + $0x8] sm:$0xff] %v2828
    %3213 = vst [vmem:[#allocation7 + $0x10] sm:$0xff] %v2829
    %3214 = vst [vmem:[#allocation7 + $0x18] sm:$0xff] %v2830
    %3215 = vst [vmem:[#allocation7 + $0x20] sm:$0xff] %v2831
    %3216 = vst [vmem:[#allocation7 + $0x28] sm:$0xff] %v2832
    %3217 = vst [vmem:[#allocation7 + $0x30] sm:$0xff] %v2833
    %3218 = vst [vmem:[#allocation7 + $0x38] sm:$0xff] %v2834
    %3219 = vst [vmem:[#allocation7 + $0x40] sm:$0xff] %v2835
    %3220 = vst [vmem:[#allocation7 + $0x48] sm:$0xff] %v2836
    %3221 = vst [vmem:[#allocation7 + $0x50] sm:$0xff] %v2837
    %3222 = vst [vmem:[#allocation7 + $0x58] sm:$0xff] %v2838
    %3223 = vst [vmem:[#allocation7 + $0x60] sm:$0xff] %v2839
    %3224 = vst [vmem:[#allocation7 + $0x68] sm:$0xff] %v2840
    %3225 = vst [vmem:[#allocation7 + $0x70] sm:$0xff] %v2841
    %3226 = vst [vmem:[#allocation7 + $0x78] sm:$0xff] %v2842
    %3227 = vst [vmem:[#allocation7 + $0x80] sm:$0xff] %v2843
    %3228 = vst [vmem:[#allocation7 + $0x88] sm:$0xff] %v2844
    %3229 = vst [vmem:[#allocation7 + $0x90] sm:$0xff] %v2845
    %3230 = vst [vmem:[#allocation7 + $0x98] sm:$0xff] %v2846
    %3231 = vst [vmem:[#allocation7 + $0xa0] sm:$0xff] %v2847
    %3232 = vst [vmem:[#allocation7 + $0xa8] sm:$0xff] %v2848
    %3233 = vst [vmem:[#allocation7 + $0xb0] sm:$0xff] %v2849
    %3234 = vst [vmem:[#allocation7 + $0xb8] sm:$0xff] %v2850
    %3235 = vst [vmem:[#allocation7 + $0xc0] sm:$0xff] %v2851
    %3236 = vst [vmem:[#allocation7 + $0xc8] sm:$0xff] %v2852
    %3237 = vst [vmem:[#allocation7 + $0xd0] sm:$0xff] %v2853
    %3238 = vst [vmem:[#allocation7 + $0xd8] sm:$0xff] %v2854
    %3239 = vst [vmem:[#allocation7 + $0xe0] sm:$0xff] %v2855
    %3240 = vst [vmem:[#allocation7 + $0xe8] sm:$0xff] %v2856
    %3241 = vst [vmem:[#allocation7 + $0xf0] sm:$0xff] %v2857
    %3242 = vst [vmem:[#allocation7 + $0xf8] sm:$0xff] %v2858
    %3243 = vst [vmem:[#allocation7 + $0x100] sm:$0xff] %v2859
    %3244 = vst [vmem:[#allocation7 + $0x108] sm:$0xff] %v2860
    %3245 = vst [vmem:[#allocation7 + $0x110] sm:$0xff] %v2861
    %3246 = vst [vmem:[#allocation7 + $0x118] sm:$0xff] %v2862
    %3247 = vst [vmem:[#allocation7 + $0x120] sm:$0xff] %v2863
    %3248 = vst [vmem:[#allocation7 + $0x128] sm:$0xff] %v2864
    %3249 = vst [vmem:[#allocation7 + $0x130] sm:$0xff] %v2865
    %3250 = vst [vmem:[#allocation7 + $0x138] sm:$0xff] %v2866
    %3251 = vst [vmem:[#allocation7 + $0x140] sm:$0xff] %v2867
    %3252 = vst [vmem:[#allocation7 + $0x148] sm:$0xff] %v2868
    %3253 = vst [vmem:[#allocation7 + $0x150] sm:$0xff] %v2869
    %3254 = vst [vmem:[#allocation7 + $0x158] sm:$0xff] %v2870
    %3255 = vst [vmem:[#allocation7 + $0x160] sm:$0xff] %v2871
    %3256 = vst [vmem:[#allocation7 + $0x168] sm:$0xff] %v2872
    %3257 = vst [vmem:[#allocation7 + $0x170] sm:$0xff] %v2873
    %3258 = vst [vmem:[#allocation7 + $0x178] sm:$0xff] %v2874
    %3259 = vst [vmem:[#allocation7 + $0x180] sm:$0xff] %v2875
    %3260 = vst [vmem:[#allocation7 + $0x188] sm:$0xff] %v2876
    %3261 = vst [vmem:[#allocation7 + $0x190] sm:$0xff] %v2877
    %3262 = vst [vmem:[#allocation7 + $0x198] sm:$0xff] %v2878
    %3263 = vst [vmem:[#allocation7 + $0x1a0] sm:$0xff] %v2879
    %3264 = vst [vmem:[#allocation7 + $0x1a8] sm:$0xff] %v2880
    %3265 = vst [vmem:[#allocation7 + $0x1b0] sm:$0xff] %v2881
    %3266 = vst [vmem:[#allocation7 + $0x1b8] sm:$0xff] %v2882
    %3267 = vst [vmem:[#allocation7 + $0x1c0] sm:$0xff] %v2883
    %3268 = vst [vmem:[#allocation7 + $0x1c8] sm:$0xff] %v2884
    %3269 = vst [vmem:[#allocation7 + $0x1d0] sm:$0xff] %v2885
    %3270 = vst [vmem:[#allocation7 + $0x1d8] sm:$0xff] %v2886
    %3271 = vst [vmem:[#allocation7 + $0x1e0] sm:$0xff] %v2887
    %3272 = vst [vmem:[#allocation7 + $0x1e8] sm:$0xff] %v2888
    %3273 = vst [vmem:[#allocation7 + $0x1f0] sm:$0xff] %v2889
    %3274 = vst [vmem:[#allocation7 + $0x1f8] sm:$0xff] %v2890
    %3275 = vst [vmem:[#allocation7 + $0x200] sm:$0xff] %v2891
    %3276 = vst [vmem:[#allocation7 + $0x208] sm:$0xff] %v2892
    %3277 = vst [vmem:[#allocation7 + $0x210] sm:$0xff] %v2893
    %3278 = vst [vmem:[#allocation7 + $0x218] sm:$0xff] %v2894
    %3279 = vst [vmem:[#allocation7 + $0x220] sm:$0xff] %v2895
    %3280 = vst [vmem:[#allocation7 + $0x228] sm:$0xff] %v2896
    %3281 = vst [vmem:[#allocation7 + $0x230] sm:$0xff] %v2897
    %3282 = vst [vmem:[#allocation7 + $0x238] sm:$0xff] %v2898
    %3283 = vst [vmem:[#allocation7 + $0x240] sm:$0xff] %v2899
    %3284 = vst [vmem:[#allocation7 + $0x248] sm:$0xff] %v2900
    %3285 = vst [vmem:[#allocation7 + $0x250] sm:$0xff] %v2901
    %3286 = vst [vmem:[#allocation7 + $0x258] sm:$0xff] %v2902
    %3287 = vst [vmem:[#allocation7 + $0x260] sm:$0xff] %v2903
    %3288 = vst [vmem:[#allocation7 + $0x268] sm:$0xff] %v2904
    %3289 = vst [vmem:[#allocation7 + $0x270] sm:$0xff] %v2905
    %3290 = vst [vmem:[#allocation7 + $0x278] sm:$0xff] %v2906
    %3291 = vst [vmem:[#allocation7 + $0x280] sm:$0xff] %v2907
    %3292 = vst [vmem:[#allocation7 + $0x288] sm:$0xff] %v2908
    %3293 = vst [vmem:[#allocation7 + $0x290] sm:$0xff] %v2909
    %3294 = vst [vmem:[#allocation7 + $0x298] sm:$0xff] %v2910
    %3295 = vst [vmem:[#allocation7 + $0x2a0] sm:$0xff] %v2911
    %3296 = vst [vmem:[#allocation7 + $0x2a8] sm:$0xff] %v2912
    %3297 = vst [vmem:[#allocation7 + $0x2b0] sm:$0xff] %v2913
    %3298 = vst [vmem:[#allocation7 + $0x2b8] sm:$0xff] %v2914
    %3299 = vst [vmem:[#allocation7 + $0x2c0] sm:$0xff] %v2915
    %3300 = vst [vmem:[#allocation7 + $0x2c8] sm:$0xff] %v2916
    %3301 = vst [vmem:[#allocation7 + $0x2d0] sm:$0xff] %v2917
    %3302 = vst [vmem:[#allocation7 + $0x2d8] sm:$0xff] %v2918
    %3303 = vst [vmem:[#allocation7 + $0x2e0] sm:$0xff] %v2919
    %3304 = vst [vmem:[#allocation7 + $0x2e8] sm:$0xff] %v2920
    %3305 = vst [vmem:[#allocation7 + $0x2f0] sm:$0xff] %v2921
    %3306 = vst [vmem:[#allocation7 + $0x2f8] sm:$0xff] %v2922
    %3307 = vst [vmem:[#allocation7 + $0x300] sm:$0xff] %v2923
    %3308 = vst [vmem:[#allocation7 + $0x308] sm:$0xff] %v2924
    %3309 = vst [vmem:[#allocation7 + $0x310] sm:$0xff] %v2925
    %3310 = vst [vmem:[#allocation7 + $0x318] sm:$0xff] %v2926
    %3311 = vst [vmem:[#allocation7 + $0x320] sm:$0xff] %v2927
    %3312 = vst [vmem:[#allocation7 + $0x328] sm:$0xff] %v2928
    %3313 = vst [vmem:[#allocation7 + $0x330] sm:$0xff] %v2929
    %3314 = vst [vmem:[#allocation7 + $0x338] sm:$0xff] %v2930
    %3315 = vst [vmem:[#allocation7 + $0x340] sm:$0xff] %v2931
    %3316 = vst [vmem:[#allocation7 + $0x348] sm:$0xff] %v2932
    %3317 = vst [vmem:[#allocation7 + $0x350] sm:$0xff] %v2933
    %3318 = vst [vmem:[#allocation7 + $0x358] sm:$0xff] %v2934
    %3319 = vst [vmem:[#allocation7 + $0x360] sm:$0xff] %v2935
    %3320 = vst [vmem:[#allocation7 + $0x368] sm:$0xff] %v2936
    %3321 = vst [vmem:[#allocation7 + $0x370] sm:$0xff] %v2937
    %3322 = vst [vmem:[#allocation7 + $0x378] sm:$0xff] %v2938
    %3323 = vst [vmem:[#allocation7 + $0x380] sm:$0xff] %v2939
    %3324 = vst [vmem:[#allocation7 + $0x388] sm:$0xff] %v2940
    %3325 = vst [vmem:[#allocation7 + $0x390] sm:$0xff] %v2941
    %3326 = vst [vmem:[#allocation7 + $0x398] sm:$0xff] %v2942
    %3327 = vst [vmem:[#allocation7 + $0x3a0] sm:$0xff] %v2943
    %3328 = vst [vmem:[#allocation7 + $0x3a8] sm:$0xff] %v2944
    %3329 = vst [vmem:[#allocation7 + $0x3b0] sm:$0xff] %v2945
    %3330 = vst [vmem:[#allocation7 + $0x3b8] sm:$0xff] %v2946
    %3331 = vst [vmem:[#allocation7 + $0x3c0] sm:$0xff] %v2947
    %3332 = vst [vmem:[#allocation7 + $0x3c8] sm:$0xff] %v2948
    %3333 = vst [vmem:[#allocation7 + $0x3d0] sm:$0xff] %v2949
    %3334 = vst [vmem:[#allocation7 + $0x3d8] sm:$0xff] %v2950
    %3335 = vst [vmem:[#allocation7 + $0x3e0] sm:$0xff] %v2951
    %3336 = vst [vmem:[#allocation7 + $0x3e8] sm:$0xff] %v2952
    %3337 = vst [vmem:[#allocation7 + $0x3f0] sm:$0xff] %v2953
    %3338 = vst [vmem:[#allocation7 + $0x3f8] sm:$0xff] %v2954
    %3339 = vst [vmem:[#allocation7 + $0x400] sm:$0xff] %v2955
    %3340 = vst [vmem:[#allocation7 + $0x408] sm:$0xff] %v2956
    %3341 = vst [vmem:[#allocation7 + $0x410] sm:$0xff] %v2957
    %3342 = vst [vmem:[#allocation7 + $0x418] sm:$0xff] %v2958
    %3343 = vst [vmem:[#allocation7 + $0x420] sm:$0xff] %v2959
    %3344 = vst [vmem:[#allocation7 + $0x428] sm:$0xff] %v2960
    %3345 = vst [vmem:[#allocation7 + $0x430] sm:$0xff] %v2961
    %3346 = vst [vmem:[#allocation7 + $0x438] sm:$0xff] %v2962
    %3347 = vst [vmem:[#allocation7 + $0x440] sm:$0xff] %v2963
    %3348 = vst [vmem:[#allocation7 + $0x448] sm:$0xff] %v2964
    %3349 = vst [vmem:[#allocation7 + $0x450] sm:$0xff] %v2965
    %3350 = vst [vmem:[#allocation7 + $0x458] sm:$0xff] %v2966
    %3351 = vst [vmem:[#allocation7 + $0x460] sm:$0xff] %v2967
    %3352 = vst [vmem:[#allocation7 + $0x468] sm:$0xff] %v2968
    %3353 = vst [vmem:[#allocation7 + $0x470] sm:$0xff] %v2969
    %3354 = vst [vmem:[#allocation7 + $0x478] sm:$0xff] %v2970
    %3355 = vst [vmem:[#allocation7 + $0x480] sm:$0xff] %v2971
    %3356 = vst [vmem:[#allocation7 + $0x488] sm:$0xff] %v2972
    %3357 = vst [vmem:[#allocation7 + $0x490] sm:$0xff] %v2973
    %3358 = vst [vmem:[#allocation7 + $0x498] sm:$0xff] %v2974
    %3359 = vst [vmem:[#allocation7 + $0x4a0] sm:$0xff] %v2975
    %3360 = vst [vmem:[#allocation7 + $0x4a8] sm:$0xff] %v2976
    %3361 = vst [vmem:[#allocation7 + $0x4b0] sm:$0xff] %v2977
    %3362 = vst [vmem:[#allocation7 + $0x4b8] sm:$0xff] %v2978
    %3363 = vst [vmem:[#allocation7 + $0x4c0] sm:$0xff] %v2979
    %3364 = vst [vmem:[#allocation7 + $0x4c8] sm:$0xff] %v2980
    %3365 = vst [vmem:[#allocation7 + $0x4d0] sm:$0xff] %v2981
    %3366 = vst [vmem:[#allocation7 + $0x4d8] sm:$0xff] %v2982
    %3367 = vst [vmem:[#allocation7 + $0x4e0] sm:$0xff] %v2983
    %3368 = vst [vmem:[#allocation7 + $0x4e8] sm:$0xff] %v2984
    %3369 = vst [vmem:[#allocation7 + $0x4f0] sm:$0xff] %v2985
    %3370 = vst [vmem:[#allocation7 + $0x4f8] sm:$0xff] %v2986
    %3371 = vst [vmem:[#allocation7 + $0x500] sm:$0xff] %v2987
    %3372 = vst [vmem:[#allocation7 + $0x508] sm:$0xff] %v2988
    %3373 = vst [vmem:[#allocation7 + $0x510] sm:$0xff] %v2989
    %3374 = vst [vmem:[#allocation7 + $0x518] sm:$0xff] %v2990
    %3375 = vst [vmem:[#allocation7 + $0x520] sm:$0xff] %v2991
    %3376 = vst [vmem:[#allocation7 + $0x528] sm:$0xff] %v2992
    %3377 = vst [vmem:[#allocation7 + $0x530] sm:$0xff] %v2993
    %3378 = vst [vmem:[#allocation7 + $0x538] sm:$0xff] %v2994
    %3379 = vst [vmem:[#allocation7 + $0x540] sm:$0xff] %v2995
    %3380 = vst [vmem:[#allocation7 + $0x548] sm:$0xff] %v2996
    %3381 = vst [vmem:[#allocation7 + $0x550] sm:$0xff] %v2997
    %3382 = vst [vmem:[#allocation7 + $0x558] sm:$0xff] %v2998
    %3383 = vst [vmem:[#allocation7 + $0x560] sm:$0xff] %v2999
    %3384 = vst [vmem:[#allocation7 + $0x568] sm:$0xff] %v3000
    %3385 = vst [vmem:[#allocation7 + $0x570] sm:$0xff] %v3001
    %3386 = vst [vmem:[#allocation7 + $0x578] sm:$0xff] %v3002
    %3387 = vst [vmem:[#allocation7 + $0x580] sm:$0xff] %v3003
    %3388 = vst [vmem:[#allocation7 + $0x588] sm:$0xff] %v3004
    %3389 = vst [vmem:[#allocation7 + $0x590] sm:$0xff] %v3005
    %3390 = vst [vmem:[#allocation7 + $0x598] sm:$0xff] %v3006
    %3391 = vst [vmem:[#allocation7 + $0x5a0] sm:$0xff] %v3007
    %3392 = vst [vmem:[#allocation7 + $0x5a8] sm:$0xff] %v3008
    %3393 = vst [vmem:[#allocation7 + $0x5b0] sm:$0xff] %v3009
    %3394 = vst [vmem:[#allocation7 + $0x5b8] sm:$0xff] %v3010
    %3395 = vst [vmem:[#allocation7 + $0x5c0] sm:$0xff] %v3011
    %3396 = vst [vmem:[#allocation7 + $0x5c8] sm:$0xff] %v3012
    %3397 = vst [vmem:[#allocation7 + $0x5d0] sm:$0xff] %v3013
    %3398 = vst [vmem:[#allocation7 + $0x5d8] sm:$0xff] %v3014
    %3399 = vst [vmem:[#allocation7 + $0x5e0] sm:$0xff] %v3015
    %3400 = vst [vmem:[#allocation7 + $0x5e8] sm:$0xff] %v3016
    %3401 = vst [vmem:[#allocation7 + $0x5f0] sm:$0xff] %v3017
    %3402 = vst [vmem:[#allocation7 + $0x5f8] sm:$0xff] %v3018
    // Predicated region
    $region18: #{tpu_custom_call.1} parent=1 // pred_check
      _
    $region19: #{tpu_custom_call.1} parent=1 // pred_check_branch
      %3404 = sbr.rel (0) target = $region21
    $region20: #{tpu_custom_call.1} parent=1 // pred_region
      %s3406 = ssub.s32 24576, 24576
      %3407 = vsyncadd [#allocation4], %s3406
      %s3408 = sshll.u32 [#allocation7], 4
      %s3409 = int_to_ptr.vmem [resolvable:$true] %s3408
      %3414 = dma.vmem_to_hbm [thread:$0]  %s3409, 24576, %s2, [#allocation4], 384, 384, 24
    $region21: #{tpu_custom_call.1} parent=1 // pred_fallthru
      _
    // Predicated region
    $region22: #{tpu_custom_call.1} parent=1 // pred_check
      _
    $region23: #{tpu_custom_call.1} parent=1 // pred_check_branch
      %3416 = sbr.rel (0) target = $region25
    $region24: #{tpu_custom_call.1} parent=1 // pred_region
      %3417 = dma.done [#allocation4], 24576
    $region25: #{tpu_custom_call.1} parent=1 // pred_fallthru
      _
    %3418 = vsyncpa [#allocation3], 1
    %3419 = vsyncpa [#allocation6], 1
    %3420 = vsyncpa [#allocation4], 1

</llo_original>
